<compile_context>
chip_gen: v7x
topology: tpu7x:2x2x1
jax: 0.10.0
libtpu: 0.0.40
codegen_flags: <defaults>
</compile_context>

<pallas_src>
import functools

import jax
import jax.numpy as jnp
from jax.experimental import pallas as pl
from jax.experimental.pallas import tpu as pltpu


# ----------------------------- fused FFN Pallas kernel -----------------------------

def _ffn_fused_kernel(x_ref, w1_ref, b1_ref, wdw_ref, bdw_ref, w2_ref, b2_ref,
                      o_ref, hid_ref, *, H, W, rows):
    """One image per grid step (channels on lanes for the hidden, pixels on lanes out).

    x_ref   : (H+2, Wp, Cin)   bf16 zero-halo-padded NHWC input (Wp = W+2 rounded to 8)
    w1_ref  : (Cin, Chid)      bf16 pointwise1 weight
    b1_ref  : (1, Chid)        f32
    wdw_ref : (3, 3, Chid)     f32 depthwise 3x3 weight, tap-major, channels on lanes
    bdw_ref : (1, 1, Chid)     f32
    w2_ref  : (Cout, Chid)     bf16 pointwise2 weight (torch layout, no transpose)
    b2_ref  : (Cout, 1)        f32
    o_ref   : (Cout, H*W)      f32 lane-dense output (reshaped to NCHW in the wrapper)
    hid_ref : (H+2, Wp, Chid)  f32 VMEM scratch holding the hidden activation (+halo)
    """
    Hp, Wp, Cin = x_ref.shape
    Chid = hid_ref.shape[-1]

    # ---- pointwise1: per-pixel matmul on the MXU (bf16 operands, f32 accumulation) ----
    x = x_ref[...].reshape(Hp * Wp, Cin)
    h = jnp.dot(x, w1_ref[...], preferred_element_type=jnp.float32) + b1_ref[...]
    hid_ref[...] = h.reshape(Hp, Wp, Chid)            # full, aligned VMEM store

    # ---- zero only the 1-pixel halo border the 3x3 taps read ----
    # (the padded x pixels were zero, so pw1 wrote b1 there; the depthwise conv expects
    #  zero padding).  Four tiny slab stores instead of a full-size iota/where mask.
    zrow = jnp.zeros((1, Wp, Chid), jnp.float32)
    zcol = jnp.zeros((Hp, 1, Chid), jnp.float32)
    hid_ref[0:1, :, :] = zrow
    hid_ref[H + 1:H + 2, :, :] = zrow
    hid_ref[:, 0:1, :] = zcol
    hid_ref[:, W + 1:W + 2, :] = zcol

    wdw = wdw_ref[...]                                 # (3, 3, Chid)
    bdw = bdw_ref[...]                                 # (1, 1, Chid)
    w2 = w2_ref[...]                                   # (Cout, Chid) bf16
    b2 = b2_ref[...]                                   # (Cout, 1)

    # ---- depthwise 3x3 + bias + ReLU (VPU) and pointwise2 (MXU), in row strips ----
    # Strips are independent, so the MXU pw2 matmul of strip s-1 co-issues with the
    # VPU 9-tap MAC of strip s, and the live acc/col vreg set stays bounded.
    for r0 in range(0, H, rows):
        acc = jnp.zeros((rows, W, Chid), jnp.float32)
        for dj in range(3):
            col = hid_ref[r0:r0 + rows + 2, dj:dj + W, :]      # (rows+2, W, Chid)
            for di in range(3):
                acc = acc + col[di:di + rows] * wdw[di, dj]    # (Chid,) broadcast
        acc = jnp.maximum(acc + bdw, 0.0)
        out_s = jax.lax.dot_general(                            # (Cout, rows*W)
            w2, acc.reshape(rows * W, Chid).astype(jnp.bfloat16),
            dimension_numbers=(((1,), (1,)), ((), ())),
            preferred_element_type=jnp.float32)
        o_ref[:, r0 * W:(r0 + rows) * W] = out_s + b2           # lane-dense store


def _pick_strip_rows(H, W):
    """Smallest strip height that divides H and keeps each output store a multiple of
    128 lanes (unmasked vst); falls back to one strip for awkward shapes."""
    for r in (8, 16, 32, 64):
        if r < H and H % r == 0 and (r * W) % 128 == 0:
            return r
    return H


def ffn_forward(x_nchw, params):
    """FFN forward.  x_nchw: (B, Cin, H, W) float32 (PyTorch layout) -> (B, Cout, H, W)."""
    w1, b1 = params["pw1_w"], params["pw1_b"]          # (Chid, Cin, 1, 1), (Chid,)
    wdw, bdw = params["dw_w"], params["dw_b"]          # (Chid, 1, 3, 3),  (Chid,)
    w2, b2 = params["pw2_w"], params["pw2_b"]          # (Cout, Chid, 1, 1), (Cout,)
    B, Cin, H, W = x_nchw.shape
    Chid, Cout = w1.shape[0], w2.shape[0]
    Hp = H + 2
    Wp = ((W + 2 + 7) // 8) * 8                        # halo-padded width rounded up to 8
    rows = _pick_strip_rows(H, W)

    # NCHW -> NHWC, bf16 cast (halves input DMA), zero halo for the 3x3 window.
    # TODO(synk): a channels-first end-to-end kernel (3x3 taps as pltpu.roll lane
    # shifts) would also remove this input transpose/pad; left as a follow-up refactor.
    x = jnp.transpose(x_nchw, (0, 2, 3, 1)).astype(jnp.bfloat16)
    xp = jnp.pad(x, ((0, 0), (1, 1), (1, Wp - W - 1), (0, 0)))

    # Torch conv weights -> matmul / tap-major layouts (tiny, one-time relayouts).
    w1f = jnp.transpose(w1[:, :, 0, 0]).astype(jnp.bfloat16)    # (Cin, Chid)
    w2f = w2[:, :, 0, 0].astype(jnp.bfloat16)                   # (Cout, Chid)
    wdwf = jnp.transpose(wdw[:, 0, :, :], (1, 2, 0))            # (3, 3, Chid) f32

    kernel = functools.partial(_ffn_fused_kernel, H=H, W=W, rows=rows)
    grid_spec = pltpu.PrefetchScalarGridSpec(
        num_scalar_prefetch=0,
        grid=(B,),
        in_specs=[
            pl.BlockSpec((None, Hp, Wp, Cin), lambda b: (b, 0, 0, 0)),
            pl.BlockSpec((Cin, Chid), lambda b: (0, 0)),
            pl.BlockSpec((1, Chid), lambda b: (0, 0)),
            pl.BlockSpec((3, 3, Chid), lambda b: (0, 0, 0)),
            pl.BlockSpec((1, 1, Chid), lambda b: (0, 0, 0)),
            pl.BlockSpec((Cout, Chid), lambda b: (0, 0)),
            pl.BlockSpec((Cout, 1), lambda b: (0, 0)),
        ],
        out_specs=pl.BlockSpec((None, Cout, H * W), lambda b: (b, 0, 0)),
        scratch_shapes=[pltpu.VMEM((Hp, Wp, Chid), jnp.float32)],
    )
    out = pl.pallas_call(
        kernel,
        out_shape=jax.ShapeDtypeStruct((B, Cout, H * W), jnp.float32),
        grid_spec=grid_spec,
        compiler_params=pltpu.CompilerParams(
            dimension_semantics=("parallel",),         # B >= 2 keeps both v7x TCs busy
            vmem_limit_bytes=32 * 1024 * 1024),        # actual per-step use is ~0.2 MiB
    )(xp, w1f, b1.reshape(1, Chid), wdwf, bdw.reshape(1, 1, Chid),
      w2f, b2.reshape(Cout, 1))
    # TODO(synk): for large H*W add a second "parallel" grid axis over row tiles with a
    # 1-row halo (threshold ~8-16 MiB hidden on v7x's 64 MiB VMEM, ~2x that on v5e/v6e).
    return out.reshape(B, Cout, H, W)                  # free split of H*W -> (H, W)


# ----------------------------- plain-JAX reference -----------------------------

def ffn_reference(x_nchw, params):
    """Reference with the same bf16-operand / f32-accumulate matmul policy as the kernel."""
    x = jnp.transpose(x_nchw, (0, 2, 3, 1)).astype(jnp.float32)
    w1 = params["pw1_w"][:, :, 0, 0]                   # (Chid, Cin)
    h = jnp.einsum("bhwc,oc->bhwo", x.astype(jnp.bfloat16), w1.astype(jnp.bfloat16),
                   preferred_element_type=jnp.float32) + params["pw1_b"]
    B, H, W, Chid = h.shape
    hp = jnp.pad(h, ((0, 0), (1, 1), (1, 1), (0, 0)))
    wdw = params["dw_w"][:, 0, :, :]                   # (Chid, 3, 3)
    acc = jnp.zeros_like(h)
    for di in range(3):
        for dj in range(3):
            acc = acc + hp[:, di:di + H, dj:dj + W, :] * wdw[:, di, dj][None, None, None, :]
    acc = jnp.maximum(acc + params["dw_b"], 0.0)
    w2 = params["pw2_w"][:, :, 0, 0]                   # (Cout, Chid)
    out = jnp.einsum("bhwc,oc->bhwo", acc.astype(jnp.bfloat16), w2.astype(jnp.bfloat16),
                     preferred_element_type=jnp.float32) + params["pw2_b"]
    return jnp.transpose(out, (0, 3, 1, 2))


# ----------------------------- deterministic params -----------------------------

def init_ffn_params(key, in_features, hidden_features=None, out_features=None):
    """Deterministic init mirroring torch Conv2d defaults (uniform +/- 1/sqrt(fan_in))."""
    hidden_features = hidden_features or in_features
    out_features = out_features or in_features
    ks = jax.random.split(key, 6)

    def u(k, shape, fan_in):
        bound = 1.0 / (fan_in ** 0.5)
        return jax.random.uniform(k, shape, jnp.float32, -bound, bound)

    return {
        "pw1_w": u(ks[0], (hidden_features, in_features, 1, 1), in_features),
        "pw1_b": u(ks[1], (hidden_features,), in_features),
        "dw_w": u(ks[2], (hidden_features, 1, 3, 3), 9),
        "dw_b": u(ks[3], (hidden_features,), 9),
        "pw2_w": u(ks[4], (out_features, hidden_features, 1, 1), hidden_features),
        "pw2_b": u(ks[5], (out_features,), hidden_features),
    }


if __name__ == "__main__":
    # FFN(in_features=32, hidden_features=64, out_features=None) -> out_features = 32.
    B, Cin, H, W = 2, 32, 16, 16
    hidden, Cout = 64, 32
    key = jax.random.PRNGKey(0)
    kp, kx = jax.random.split(key)
    params = init_ffn_params(kp, Cin, hidden, Cout)
    x = jax.random.normal(kx, (B, Cin, H, W), jnp.float32)

    y = jax.jit(ffn_forward)(x, params)
    y = jax.block_until_ready(y)
    assert y.shape == (B, Cout, H, W), y.shape
    assert bool(jnp.all(jnp.isfinite(y)))

    y_ref = ffn_reference(x, params)
    max_err = float(jnp.max(jnp.abs(y - y_ref)))
    assert bool(jnp.allclose(y, y_ref, rtol=1e-2, atol=1e-2)), f"max_err={max_err}"
    print("KERNEL_OK")
</pallas_src>

<mosaic_0001>
module attributes {stable_mosaic.version = 11 : i64} {
  func.func @_ffn_fused_kernel(%arg0: i32, %arg1: memref<1x18x24x32xbf16, #tpu.memory_space<vmem>>, %arg2: memref<32x64xbf16, #tpu.memory_space<vmem>>, %arg3: memref<1x64xf32, #tpu.memory_space<vmem>>, %arg4: memref<3x3x64xf32, #tpu.memory_space<vmem>>, %arg5: memref<1x1x64xf32, #tpu.memory_space<vmem>>, %arg6: memref<32x64xbf16, #tpu.memory_space<vmem>>, %arg7: memref<32x1xf32, #tpu.memory_space<vmem>>, %arg8: memref<1x32x256xf32, #tpu.memory_space<vmem>>, %arg9: memref<18x24x64xf32, #tpu.memory_space<vmem>>) attributes {dimension_semantics = [#tpu.dimension_semantics<parallel>], iteration_bounds = array<i64: 2>, scalar_prefetch = 0 : i64, scratch_operands = 1 : i64, tpu.core_type = #tpu.core_type<tc>, window_params = [{transform_indices = @transform_0, window_bounds = array<i64: 1, 18, 24, 32>}, {pipeline_mode = #tpu.pipeline_mode<synchronous>, transform_indices = @transform_1, window_bounds = array<i64: 32, 64>}, {pipeline_mode = #tpu.pipeline_mode<synchronous>, transform_indices = @transform_2, window_bounds = array<i64: 1, 64>}, {pipeline_mode = #tpu.pipeline_mode<synchronous>, transform_indices = @transform_3, window_bounds = array<i64: 3, 3, 64>}, {pipeline_mode = #tpu.pipeline_mode<synchronous>, transform_indices = @transform_4, window_bounds = array<i64: 1, 1, 64>}, {pipeline_mode = #tpu.pipeline_mode<synchronous>, transform_indices = @transform_5, window_bounds = array<i64: 32, 64>}, {pipeline_mode = #tpu.pipeline_mode<synchronous>, transform_indices = @transform_6, window_bounds = array<i64: 32, 1>}, {transform_indices = @transform_7, window_bounds = array<i64: 1, 32, 256>}]} {
    %c0 = arith.constant 0 : index
    %c0_0 = arith.constant 0 : index
    %c0_1 = arith.constant 0 : index
    %c0_2 = arith.constant 0 : index
    %0 = vector.load %arg1[%c0, %c0_0, %c0_1, %c0_2] : memref<1x18x24x32xbf16, #tpu.memory_space<vmem>>, vector<1x18x24x32xbf16>
    %1 = vector.shape_cast %0 : vector<1x18x24x32xbf16> to vector<18x24x32xbf16>
    %2 = vector.shape_cast %1 : vector<18x24x32xbf16> to vector<432x32xbf16>
    %c0_3 = arith.constant 0 : index
    %c0_4 = arith.constant 0 : index
    %3 = vector.load %arg2[%c0_3, %c0_4] : memref<32x64xbf16, #tpu.memory_space<vmem>>, vector<32x64xbf16>
    %cst = arith.constant dense<0.000000e+00> : vector<432x64xf32>
    %4 = tpu.matmul %2, %3, %cst {dimension_numbers = #tpu.dot_dimension_numbers<[1], [0], [0], [1], [0, 0, 1, 1], [], []>} : vector<432x32xbf16>, vector<32x64xbf16>, vector<432x64xf32> -> vector<432x64xf32>
    %c0_5 = arith.constant 0 : index
    %c0_6 = arith.constant 0 : index
    %5 = vector.load %arg3[%c0_5, %c0_6] : memref<1x64xf32, #tpu.memory_space<vmem>>, vector<1x64xf32>
    %6 = vector.broadcast %5 : vector<1x64xf32> to vector<432x64xf32>
    %7 = arith.addf %4, %6 : vector<432x64xf32>
    %8 = vector.shape_cast %7 : vector<432x64xf32> to vector<18x24x64xf32>
    %c0_7 = arith.constant 0 : index
    %c0_8 = arith.constant 0 : index
    %c0_9 = arith.constant 0 : index
    %9 = vector.load %arg9[%c0_7, %c0_8, %c0_9] : memref<18x24x64xf32, #tpu.memory_space<vmem>>, vector<18x24x64xf32>
    tpu.vector_store %arg9[%c0_7, %c0_8, %c0_9], %8 {strides = array<i32>} : memref<18x24x64xf32, #tpu.memory_space<vmem>>, vector<18x24x64xf32>,
    %cst_10 = arith.constant 0.000000e+00 : f32
    %10 = vector.broadcast %cst_10 : f32 to vector<1x24x64xf32>
    %cst_11 = arith.constant 0.000000e+00 : f32
    %11 = vector.broadcast %cst_11 : f32 to vector<18x1x64xf32>
    %c0_12 = arith.constant 0 : index
    %c0_13 = arith.constant 0 : index
    %c0_14 = arith.constant 0 : index
    %12 = vector.load %arg9[%c0_12, %c0_13, %c0_14] : memref<18x24x64xf32, #tpu.memory_space<vmem>>, vector<1x24x64xf32>
    tpu.vector_store %arg9[%c0_12, %c0_13, %c0_14], %10 {strides = array<i32>} : memref<18x24x64xf32, #tpu.memory_space<vmem>>, vector<1x24x64xf32>,
    %c17 = arith.constant 17 : index
    %c0_15 = arith.constant 0 : index
    %c0_16 = arith.constant 0 : index
    %13 = vector.load %arg9[%c17, %c0_15, %c0_16] : memref<18x24x64xf32, #tpu.memory_space<vmem>>, vector<1x24x64xf32>
    tpu.vector_store %arg9[%c17, %c0_15, %c0_16], %10 {strides = array<i32>} : memref<18x24x64xf32, #tpu.memory_space<vmem>>, vector<1x24x64xf32>,
    %c0_17 = arith.constant 0 : index
    %c0_18 = arith.constant 0 : index
    %c0_19 = arith.constant 0 : index
    %14 = vector.load %arg9[%c0_17, %c0_18, %c0_19] : memref<18x24x64xf32, #tpu.memory_space<vmem>>, vector<18x1x64xf32>
    tpu.vector_store %arg9[%c0_17, %c0_18, %c0_19], %11 {strides = array<i32>} : memref<18x24x64xf32, #tpu.memory_space<vmem>>, vector<18x1x64xf32>,
    %c0_20 = arith.constant 0 : index
    %c17_21 = arith.constant 17 : index
    %c0_22 = arith.constant 0 : index
    %15 = vector.load %arg9[%c0_20, %c17_21, %c0_22] : memref<18x24x64xf32, #tpu.memory_space<vmem>>, vector<18x1x64xf32>
    tpu.vector_store %arg9[%c0_20, %c17_21, %c0_22], %11 {strides = array<i32>} : memref<18x24x64xf32, #tpu.memory_space<vmem>>, vector<18x1x64xf32>,
    %c0_23 = arith.constant 0 : index
    %c0_24 = arith.constant 0 : index
    %c0_25 = arith.constant 0 : index
    %16 = vector.load %arg4[%c0_23, %c0_24, %c0_25] : memref<3x3x64xf32, #tpu.memory_space<vmem>>, vector<3x3x64xf32>
    %c0_26 = arith.constant 0 : index
    %c0_27 = arith.constant 0 : index
    %c0_28 = arith.constant 0 : index
    %17 = vector.load %arg5[%c0_26, %c0_27, %c0_28] : memref<1x1x64xf32, #tpu.memory_space<vmem>>, vector<1x1x64xf32>
    %c0_29 = arith.constant 0 : index
    %c0_30 = arith.constant 0 : index
    %18 = vector.load %arg6[%c0_29, %c0_30] : memref<32x64xbf16, #tpu.memory_space<vmem>>, vector<32x64xbf16>
    %c0_31 = arith.constant 0 : index
    %c0_32 = arith.constant 0 : index
    %19 = vector.load %arg7[%c0_31, %c0_32] : memref<32x1xf32, #tpu.memory_space<vmem>>, vector<32x1xf32>
    %cst_33 = arith.constant 0.000000e+00 : f32
    %20 = vector.broadcast %cst_33 : f32 to vector<8x16x64xf32>
    %c0_34 = arith.constant 0 : index
    %c0_35 = arith.constant 0 : index
    %c0_36 = arith.constant 0 : index
    %21 = vector.load %arg9[%c0_34, %c0_35, %c0_36] : memref<18x24x64xf32, #tpu.memory_space<vmem>>, vector<10x16x64xf32>
    %22 = vector.extract_strided_slice %21 {offsets = [0, 0, 0], sizes = [8, 16, 64], strides = [1, 1, 1]} : vector<10x16x64xf32> to vector<8x16x64xf32>
    %23 = vector.extract_strided_slice %16 {offsets = [0, 0, 0], sizes = [1, 1, 64], strides = [1, 1, 1]} : vector<3x3x64xf32> to vector<1x1x64xf32>
    %24 = vector.shape_cast %23 : vector<1x1x64xf32> to vector<64xf32>
    %25 = vector.shape_cast %24 : vector<64xf32> to vector<1x1x64xf32>
    %26 = vector.broadcast %25 : vector<1x1x64xf32> to vector<8x16x64xf32>
    %27 = arith.mulf %22, %26 : vector<8x16x64xf32>
    %28 = arith.addf %20, %27 : vector<8x16x64xf32>
    %29 = vector.extract_strided_slice %21 {offsets = [1, 0, 0], sizes = [8, 16, 64], strides = [1, 1, 1]} : vector<10x16x64xf32> to vector<8x16x64xf32>
    %30 = vector.extract_strided_slice %16 {offsets = [1, 0, 0], sizes = [1, 1, 64], strides = [1, 1, 1]} : vector<3x3x64xf32> to vector<1x1x64xf32>
    %31 = vector.shape_cast %30 : vector<1x1x64xf32> to vector<64xf32>
    %32 = vector.shape_cast %31 : vector<64xf32> to vector<1x1x64xf32>
    %33 = vector.broadcast %32 : vector<1x1x64xf32> to vector<8x16x64xf32>
    %34 = arith.mulf %29, %33 : vector<8x16x64xf32>
    %35 = arith.addf %28, %34 : vector<8x16x64xf32>
    %36 = vector.extract_strided_slice %21 {offsets = [2, 0, 0], sizes = [8, 16, 64], strides = [1, 1, 1]} : vector<10x16x64xf32> to vector<8x16x64xf32>
    %37 = vector.extract_strided_slice %16 {offsets = [2, 0, 0], sizes = [1, 1, 64], strides = [1, 1, 1]} : vector<3x3x64xf32> to vector<1x1x64xf32>
    %38 = vector.shape_cast %37 : vector<1x1x64xf32> to vector<64xf32>
    %39 = vector.shape_cast %38 : vector<64xf32> to vector<1x1x64xf32>
    %40 = vector.broadcast %39 : vector<1x1x64xf32> to vector<8x16x64xf32>
    %41 = arith.mulf %36, %40 : vector<8x16x64xf32>
    %42 = arith.addf %35, %41 : vector<8x16x64xf32>
    %c0_37 = arith.constant 0 : index
    %c1 = arith.constant 1 : index
    %c0_38 = arith.constant 0 : index
    %43 = vector.load %arg9[%c0_37, %c1, %c0_38] : memref<18x24x64xf32, #tpu.memory_space<vmem>>, vector<10x16x64xf32>
    %44 = vector.extract_strided_slice %43 {offsets = [0, 0, 0], sizes = [8, 16, 64], strides = [1, 1, 1]} : vector<10x16x64xf32> to vector<8x16x64xf32>
    %45 = vector.extract_strided_slice %16 {offsets = [0, 1, 0], sizes = [1, 1, 64], strides = [1, 1, 1]} : vector<3x3x64xf32> to vector<1x1x64xf32>
    %46 = vector.shape_cast %45 : vector<1x1x64xf32> to vector<64xf32>
    %47 = vector.shape_cast %46 : vector<64xf32> to vector<1x1x64xf32>
    %48 = vector.broadcast %47 : vector<1x1x64xf32> to vector<8x16x64xf32>
    %49 = arith.mulf %44, %48 : vector<8x16x64xf32>
    %50 = arith.addf %42, %49 : vector<8x16x64xf32>
    %51 = vector.extract_strided_slice %43 {offsets = [1, 0, 0], sizes = [8, 16, 64], strides = [1, 1, 1]} : vector<10x16x64xf32> to vector<8x16x64xf32>
    %52 = vector.extract_strided_slice %16 {offsets = [1, 1, 0], sizes = [1, 1, 64], strides = [1, 1, 1]} : vector<3x3x64xf32> to vector<1x1x64xf32>
    %53 = vector.shape_cast %52 : vector<1x1x64xf32> to vector<64xf32>
    %54 = vector.shape_cast %53 : vector<64xf32> to vector<1x1x64xf32>
    %55 = vector.broadcast %54 : vector<1x1x64xf32> to vector<8x16x64xf32>
    %56 = arith.mulf %51, %55 : vector<8x16x64xf32>
    %57 = arith.addf %50, %56 : vector<8x16x64xf32>
    %58 = vector.extract_strided_slice %43 {offsets = [2, 0, 0], sizes = [8, 16, 64], strides = [1, 1, 1]} : vector<10x16x64xf32> to vector<8x16x64xf32>
    %59 = vector.extract_strided_slice %16 {offsets = [2, 1, 0], sizes = [1, 1, 64], strides = [1, 1, 1]} : vector<3x3x64xf32> to vector<1x1x64xf32>
    %60 = vector.shape_cast %59 : vector<1x1x64xf32> to vector<64xf32>
    %61 = vector.shape_cast %60 : vector<64xf32> to vector<1x1x64xf32>
    %62 = vector.broadcast %61 : vector<1x1x64xf32> to vector<8x16x64xf32>
    %63 = arith.mulf %58, %62 : vector<8x16x64xf32>
    %64 = arith.addf %57, %63 : vector<8x16x64xf32>
    %c0_39 = arith.constant 0 : index
    %c2 = arith.constant 2 : index
    %c0_40 = arith.constant 0 : index
    %65 = vector.load %arg9[%c0_39, %c2, %c0_40] : memref<18x24x64xf32, #tpu.memory_space<vmem>>, vector<10x16x64xf32>
    %66 = vector.extract_strided_slice %65 {offsets = [0, 0, 0], sizes = [8, 16, 64], strides = [1, 1, 1]} : vector<10x16x64xf32> to vector<8x16x64xf32>
    %67 = vector.extract_strided_slice %16 {offsets = [0, 2, 0], sizes = [1, 1, 64], strides = [1, 1, 1]} : vector<3x3x64xf32> to vector<1x1x64xf32>
    %68 = vector.shape_cast %67 : vector<1x1x64xf32> to vector<64xf32>
    %69 = vector.shape_cast %68 : vector<64xf32> to vector<1x1x64xf32>
    %70 = vector.broadcast %69 : vector<1x1x64xf32> to vector<8x16x64xf32>
    %71 = arith.mulf %66, %70 : vector<8x16x64xf32>
    %72 = arith.addf %64, %71 : vector<8x16x64xf32>
    %73 = vector.extract_strided_slice %65 {offsets = [1, 0, 0], sizes = [8, 16, 64], strides = [1, 1, 1]} : vector<10x16x64xf32> to vector<8x16x64xf32>
    %74 = vector.extract_strided_slice %16 {offsets = [1, 2, 0], sizes = [1, 1, 64], strides = [1, 1, 1]} : vector<3x3x64xf32> to vector<1x1x64xf32>
    %75 = vector.shape_cast %74 : vector<1x1x64xf32> to vector<64xf32>
    %76 = vector.shape_cast %75 : vector<64xf32> to vector<1x1x64xf32>
    %77 = vector.broadcast %76 : vector<1x1x64xf32> to vector<8x16x64xf32>
    %78 = arith.mulf %73, %77 : vector<8x16x64xf32>
    %79 = arith.addf %72, %78 : vector<8x16x64xf32>
    %80 = vector.extract_strided_slice %65 {offsets = [2, 0, 0], sizes = [8, 16, 64], strides = [1, 1, 1]} : vector<10x16x64xf32> to vector<8x16x64xf32>
    %81 = vector.extract_strided_slice %16 {offsets = [2, 2, 0], sizes = [1, 1, 64], strides = [1, 1, 1]} : vector<3x3x64xf32> to vector<1x1x64xf32>
    %82 = vector.shape_cast %81 : vector<1x1x64xf32> to vector<64xf32>
    %83 = vector.shape_cast %82 : vector<64xf32> to vector<1x1x64xf32>
    %84 = vector.broadcast %83 : vector<1x1x64xf32> to vector<8x16x64xf32>
    %85 = arith.mulf %80, %84 : vector<8x16x64xf32>
    %86 = arith.addf %79, %85 : vector<8x16x64xf32>
    %87 = vector.broadcast %17 : vector<1x1x64xf32> to vector<8x16x64xf32>
    %88 = arith.addf %86, %87 : vector<8x16x64xf32>
    %cst_41 = arith.constant 0.000000e+00 : f32
    %89 = vector.broadcast %cst_41 : f32 to vector<8x16x64xf32>
    %90 = arith.maximumf %88, %89 : vector<8x16x64xf32>
    %91 = vector.shape_cast %90 : vector<8x16x64xf32> to vector<128x64xf32>
    %92 = arith.truncf %91 : vector<128x64xf32> to vector<128x64xbf16>
    %cst_42 = arith.constant dense<0.000000e+00> : vector<32x128xf32>
    %93 = tpu.matmul %18, %92, %cst_42 {dimension_numbers = #tpu.dot_dimension_numbers<[1], [1], [0], [0], [0, 0, 1, 0], [], []>} : vector<32x64xbf16>, vector<128x64xbf16>, vector<32x128xf32> -> vector<32x128xf32>
    %94 = vector.broadcast %19 : vector<32x1xf32> to vector<32x128xf32>
    %95 = arith.addf %93, %94 : vector<32x128xf32>
    %c0_43 = arith.constant 0 : index
    %c0_44 = arith.constant 0 : index
    %c0_45 = arith.constant 0 : index
    %96 = vector.load %arg8[%c0_43, %c0_44, %c0_45] : memref<1x32x256xf32, #tpu.memory_space<vmem>>, vector<1x32x128xf32>
    %97 = vector.shape_cast %96 : vector<1x32x128xf32> to vector<32x128xf32>
    %98 = vector.shape_cast %95 : vector<32x128xf32> to vector<1x32x128xf32>
    tpu.vector_store %arg8[%c0_43, %c0_44, %c0_45], %98 {strides = array<i32>} : memref<1x32x256xf32, #tpu.memory_space<vmem>>, vector<1x32x128xf32>,
    %cst_46 = arith.constant 0.000000e+00 : f32
    %99 = vector.broadcast %cst_46 : f32 to vector<8x16x64xf32>
    %c8 = arith.constant 8 : index
    %c0_47 = arith.constant 0 : index
    %c0_48 = arith.constant 0 : index
    %100 = vector.load %arg9[%c8, %c0_47, %c0_48] : memref<18x24x64xf32, #tpu.memory_space<vmem>>, vector<10x16x64xf32>
    %101 = vector.extract_strided_slice %100 {offsets = [0, 0, 0], sizes = [8, 16, 64], strides = [1, 1, 1]} : vector<10x16x64xf32> to vector<8x16x64xf32>
    %102 = vector.extract_strided_slice %16 {offsets = [0, 0, 0], sizes = [1, 1, 64], strides = [1, 1, 1]} : vector<3x3x64xf32> to vector<1x1x64xf32>
    %103 = vector.shape_cast %102 : vector<1x1x64xf32> to vector<64xf32>
    %104 = vector.shape_cast %103 : vector<64xf32> to vector<1x1x64xf32>
    %105 = vector.broadcast %104 : vector<1x1x64xf32> to vector<8x16x64xf32>
    %106 = arith.mulf %101, %105 : vector<8x16x64xf32>
    %107 = arith.addf %99, %106 : vector<8x16x64xf32>
    %108 = vector.extract_strided_slice %100 {offsets = [1, 0, 0], sizes = [8, 16, 64], strides = [1, 1, 1]} : vector<10x16x64xf32> to vector<8x16x64xf32>
    %109 = vector.extract_strided_slice %16 {offsets = [1, 0, 0], sizes = [1, 1, 64], strides = [1, 1, 1]} : vector<3x3x64xf32> to vector<1x1x64xf32>
    %110 = vector.shape_cast %109 : vector<1x1x64xf32> to vector<64xf32>
    %111 = vector.shape_cast %110 : vector<64xf32> to vector<1x1x64xf32>
    %112 = vector.broadcast %111 : vector<1x1x64xf32> to vector<8x16x64xf32>
    %113 = arith.mulf %108, %112 : vector<8x16x64xf32>
    %114 = arith.addf %107, %113 : vector<8x16x64xf32>
    %115 = vector.extract_strided_slice %100 {offsets = [2, 0, 0], sizes = [8, 16, 64], strides = [1, 1, 1]} : vector<10x16x64xf32> to vector<8x16x64xf32>
    %116 = vector.extract_strided_slice %16 {offsets = [2, 0, 0], sizes = [1, 1, 64], strides = [1, 1, 1]} : vector<3x3x64xf32> to vector<1x1x64xf32>
    %117 = vector.shape_cast %116 : vector<1x1x64xf32> to vector<64xf32>
    %118 = vector.shape_cast %117 : vector<64xf32> to vector<1x1x64xf32>
    %119 = vector.broadcast %118 : vector<1x1x64xf32> to vector<8x16x64xf32>
    %120 = arith.mulf %115, %119 : vector<8x16x64xf32>
    %121 = arith.addf %114, %120 : vector<8x16x64xf32>
    %c8_49 = arith.constant 8 : index
    %c1_50 = arith.constant 1 : index
    %c0_51 = arith.constant 0 : index
    %122 = vector.load %arg9[%c8_49, %c1_50, %c0_51] : memref<18x24x64xf32, #tpu.memory_space<vmem>>, vector<10x16x64xf32>
    %123 = vector.extract_strided_slice %122 {offsets = [0, 0, 0], sizes = [8, 16, 64], strides = [1, 1, 1]} : vector<10x16x64xf32> to vector<8x16x64xf32>
    %124 = vector.extract_strided_slice %16 {offsets = [0, 1, 0], sizes = [1, 1, 64], strides = [1, 1, 1]} : vector<3x3x64xf32> to vector<1x1x64xf32>
    %125 = vector.shape_cast %124 : vector<1x1x64xf32> to vector<64xf32>
    %126 = vector.shape_cast %125 : vector<64xf32> to vector<1x1x64xf32>
    %127 = vector.broadcast %126 : vector<1x1x64xf32> to vector<8x16x64xf32>
    %128 = arith.mulf %123, %127 : vector<8x16x64xf32>
    %129 = arith.addf %121, %128 : vector<8x16x64xf32>
    %130 = vector.extract_strided_slice %122 {offsets = [1, 0, 0], sizes = [8, 16, 64], strides = [1, 1, 1]} : vector<10x16x64xf32> to vector<8x16x64xf32>
    %131 = vector.extract_strided_slice %16 {offsets = [1, 1, 0], sizes = [1, 1, 64], strides = [1, 1, 1]} : vector<3x3x64xf32> to vector<1x1x64xf32>
    %132 = vector.shape_cast %131 : vector<1x1x64xf32> to vector<64xf32>
    %133 = vector.shape_cast %132 : vector<64xf32> to vector<1x1x64xf32>
    %134 = vector.broadcast %133 : vector<1x1x64xf32> to vector<8x16x64xf32>
    %135 = arith.mulf %130, %134 : vector<8x16x64xf32>
    %136 = arith.addf %129, %135 : vector<8x16x64xf32>
    %137 = vector.extract_strided_slice %122 {offsets = [2, 0, 0], sizes = [8, 16, 64], strides = [1, 1, 1]} : vector<10x16x64xf32> to vector<8x16x64xf32>
    %138 = vector.extract_strided_slice %16 {offsets = [2, 1, 0], sizes = [1, 1, 64], strides = [1, 1, 1]} : vector<3x3x64xf32> to vector<1x1x64xf32>
    %139 = vector.shape_cast %138 : vector<1x1x64xf32> to vector<64xf32>
    %140 = vector.shape_cast %139 : vector<64xf32> to vector<1x1x64xf32>
    %141 = vector.broadcast %140 : vector<1x1x64xf32> to vector<8x16x64xf32>
    %142 = arith.mulf %137, %141 : vector<8x16x64xf32>
    %143 = arith.addf %136, %142 : vector<8x16x64xf32>
    %c8_52 = arith.constant 8 : index
    %c2_53 = arith.constant 2 : index
    %c0_54 = arith.constant 0 : index
    %144 = vector.load %arg9[%c8_52, %c2_53, %c0_54] : memref<18x24x64xf32, #tpu.memory_space<vmem>>, vector<10x16x64xf32>
    %145 = vector.extract_strided_slice %144 {offsets = [0, 0, 0], sizes = [8, 16, 64], strides = [1, 1, 1]} : vector<10x16x64xf32> to vector<8x16x64xf32>
    %146 = vector.extract_strided_slice %16 {offsets = [0, 2, 0], sizes = [1, 1, 64], strides = [1, 1, 1]} : vector<3x3x64xf32> to vector<1x1x64xf32>
    %147 = vector.shape_cast %146 : vector<1x1x64xf32> to vector<64xf32>
    %148 = vector.shape_cast %147 : vector<64xf32> to vector<1x1x64xf32>
    %149 = vector.broadcast %148 : vector<1x1x64xf32> to vector<8x16x64xf32>
    %150 = arith.mulf %145, %149 : vector<8x16x64xf32>
    %151 = arith.addf %143, %150 : vector<8x16x64xf32>
    %152 = vector.extract_strided_slice %144 {offsets = [1, 0, 0], sizes = [8, 16, 64], strides = [1, 1, 1]} : vector<10x16x64xf32> to vector<8x16x64xf32>
    %153 = vector.extract_strided_slice %16 {offsets = [1, 2, 0], sizes = [1, 1, 64], strides = [1, 1, 1]} : vector<3x3x64xf32> to vector<1x1x64xf32>
    %154 = vector.shape_cast %153 : vector<1x1x64xf32> to vector<64xf32>
    %155 = vector.shape_cast %154 : vector<64xf32> to vector<1x1x64xf32>
    %156 = vector.broadcast %155 : vector<1x1x64xf32> to vector<8x16x64xf32>
    %157 = arith.mulf %152, %156 : vector<8x16x64xf32>
    %158 = arith.addf %151, %157 : vector<8x16x64xf32>
    %159 = vector.extract_strided_slice %144 {offsets = [2, 0, 0], sizes = [8, 16, 64], strides = [1, 1, 1]} : vector<10x16x64xf32> to vector<8x16x64xf32>
    %160 = vector.extract_strided_slice %16 {offsets = [2, 2, 0], sizes = [1, 1, 64], strides = [1, 1, 1]} : vector<3x3x64xf32> to vector<1x1x64xf32>
    %161 = vector.shape_cast %160 : vector<1x1x64xf32> to vector<64xf32>
    %162 = vector.shape_cast %161 : vector<64xf32> to vector<1x1x64xf32>
    %163 = vector.broadcast %162 : vector<1x1x64xf32> to vector<8x16x64xf32>
    %164 = arith.mulf %159, %163 : vector<8x16x64xf32>
    %165 = arith.addf %158, %164 : vector<8x16x64xf32>
    %166 = vector.broadcast %17 : vector<1x1x64xf32> to vector<8x16x64xf32>
    %167 = arith.addf %165, %166 : vector<8x16x64xf32>
    %cst_55 = arith.constant 0.000000e+00 : f32
    %168 = vector.broadcast %cst_55 : f32 to vector<8x16x64xf32>
    %169 = arith.maximumf %167, %168 : vector<8x16x64xf32>
    %170 = vector.shape_cast %169 : vector<8x16x64xf32> to vector<128x64xf32>
    %171 = arith.truncf %170 : vector<128x64xf32> to vector<128x64xbf16>
    %cst_56 = arith.constant dense<0.000000e+00> : vector<32x128xf32>
    %172 = tpu.matmul %18, %171, %cst_56 {dimension_numbers = #tpu.dot_dimension_numbers<[1], [1], [0], [0], [0, 0, 1, 0], [], []>} : vector<32x64xbf16>, vector<128x64xbf16>, vector<32x128xf32> -> vector<32x128xf32>
    %173 = vector.broadcast %19 : vector<32x1xf32> to vector<32x128xf32>
    %174 = arith.addf %172, %173 : vector<32x128xf32>
    %c0_57 = arith.constant 0 : index
    %c0_58 = arith.constant 0 : index
    %c128 = arith.constant 128 : index
    %175 = vector.load %arg8[%c0_57, %c0_58, %c128] : memref<1x32x256xf32, #tpu.memory_space<vmem>>, vector<1x32x128xf32>
    %176 = vector.shape_cast %175 : vector<1x32x128xf32> to vector<32x128xf32>
    %177 = vector.shape_cast %174 : vector<32x128xf32> to vector<1x32x128xf32>
    tpu.vector_store %arg8[%c0_57, %c0_58, %c128], %177 {strides = array<i32>} : memref<1x32x256xf32, #tpu.memory_space<vmem>>, vector<1x32x128xf32>,
    return
  }
  func.func @transform_0(%arg0: i32) -> (i32, i32, i32, i32) {
    %c0_i32 = arith.constant 0 : i32
    %c0_i32_0 = arith.constant 0 : i32
    %c0_i32_1 = arith.constant 0 : i32
    %c0_i32_2 = arith.constant 0 : i32
    return %arg0, %c0_i32, %c0_i32_0, %c0_i32_1 : i32, i32, i32, i32
  }
  func.func @transform_1(%arg0: i32) -> (i32, i32) {
    %c0_i32 = arith.constant 0 : i32
    %c0_i32_0 = arith.constant 0 : i32
    %c0_i32_1 = arith.constant 0 : i32
    return %c0_i32, %c0_i32_0 : i32, i32
  }
  func.func @transform_2(%arg0: i32) -> (i32, i32) {
    %c0_i32 = arith.constant 0 : i32
    %c0_i32_0 = arith.constant 0 : i32
    %c0_i32_1 = arith.constant 0 : i32
    return %c0_i32, %c0_i32_0 : i32, i32
  }
  func.func @transform_3(%arg0: i32) -> (i32, i32, i32) {
    %c0_i32 = arith.constant 0 : i32
    %c0_i32_0 = arith.constant 0 : i32
    %c0_i32_1 = arith.constant 0 : i32
    %c0_i32_2 = arith.constant 0 : i32
    return %c0_i32, %c0_i32_0, %c0_i32_1 : i32, i32, i32
  }
  func.func @transform_4(%arg0: i32) -> (i32, i32, i32) {
    %c0_i32 = arith.constant 0 : i32
    %c0_i32_0 = arith.constant 0 : i32
    %c0_i32_1 = arith.constant 0 : i32
    %c0_i32_2 = arith.constant 0 : i32
    return %c0_i32, %c0_i32_0, %c0_i32_1 : i32, i32, i32
  }
  func.func @transform_5(%arg0: i32) -> (i32, i32) {
    %c0_i32 = arith.constant 0 : i32
    %c0_i32_0 = arith.constant 0 : i32
    %c0_i32_1 = arith.constant 0 : i32
    return %c0_i32, %c0_i32_0 : i32, i32
  }
  func.func @transform_6(%arg0: i32) -> (i32, i32) {
    %c0_i32 = arith.constant 0 : i32
    %c0_i32_0 = arith.constant 0 : i32
    %c0_i32_1 = arith.constant 0 : i32
    return %c0_i32, %c0_i32_0 : i32, i32
  }
  func.func @transform_7(%arg0: i32) -> (i32, i32, i32) {
    %c0_i32 = arith.constant 0 : i32
    %c0_i32_0 = arith.constant 0 : i32
    %c0_i32_1 = arith.constant 0 : i32
    return %arg0, %c0_i32, %c0_i32_0 : i32, i32, i32
  }
}

</mosaic_0001>

<llo_original>
// kernel: ffn_forward.1
$region0: #{ffn_forward.1}
  #allocation0 [shape = 'u32[]', space=smem, size = 0x4, offset = 0x4, fixed_abs, tag = 'smem constant byte address 0x4 - core index']
  #allocation1 [shape = 'u32[144,128]{1,0:T(1,128)}', space=vmem, size = 0x12000, scoped, tag = 'internal scratch']
  #allocation2 [shape = 'f32[18,24,64]{2,1,0:T(8,128)}', space=vmem, size = 0x36000, scoped, tag = 'scratch operand']
  %s0 = inlined_call_operand.vmem [shape: bf16[2,18,24,32], index: 0, kind: input, shape index: {}]
  %s1 = inlined_call_operand.vmem [shape: bf16[32,64], index: 1, kind: input, shape index: {}]
  %s2 = inlined_call_operand.vmem [shape: f32[1,64], index: 2, kind: input, shape index: {}]
  %s3 = inlined_call_operand.vmem [shape: f32[3,3,64], index: 3, kind: input, shape index: {}]
  %s4 = inlined_call_operand.vmem [shape: f32[1,1,64], index: 4, kind: input, shape index: {}]
  %s5 = inlined_call_operand.vmem [shape: bf16[32,64], index: 5, kind: input, shape index: {}]
  %s6 = inlined_call_operand.vmem [shape: f32[32,1], index: 6, kind: input, shape index: {}]
  %s7 = inlined_call_operand.vmem [shape: f32[2,32,256], index: 7, kind: output, shape index: {}]
  %s8 = sld [smem:[#allocation0]]
  $region61: #{ffn_forward.1} parent=0
    _
  %s10 = ssub.s32 1, %s8
  %s11 = scalar_select 0, %s10, %s8
  loop: start=0, step=1, limit=4
  $region2: #{ffn_forward.1} parent=0 // loop_pre_header
    _
  $region3: #{ffn_forward.1} parent=0 // loop_header
    %s13 = sphi 0, %s17
    %p14 = scmp.ge.s32.totalorder %s13, 4
    %s23 = sphi 0, %s25
    %s26 = sphi 0, %s23
    %s27 = sphi 0, %s26
    %s43 = sphi 0, %s27
    %s47 = sphi 0, %s47
    %s49 = sphi 0, %s47
    %s50 = sphi 0, %s49
    %s64 = sphi 0, %s50
    %s68 = sphi 0, %s68
    %s70 = sphi 0, %s68
    %s71 = sphi 0, %s70
    %s85 = sphi 0, %s71
    %s89 = sphi 0, %s89
    %s91 = sphi 0, %s89
    %s92 = sphi 0, %s91
    %s106 = sphi 0, %s92
    %s110 = sphi 0, %s110
    %s112 = sphi 0, %s110
    %s113 = sphi 0, %s112
    %s127 = sphi 0, %s113
    %s131 = sphi 0, %s131
    %s133 = sphi 0, %s131
    %s134 = sphi 0, %s133
    %s148 = sphi 0, %s134
    %s152 = sphi 0, %s152
    %s154 = sphi 0, %s152
    %s155 = sphi 0, %s154
    %s169 = sphi 0, %s155
    %s175 = sphi 0, %s177
    %s178 = sphi 0, %s175
    %s179 = sphi 0, %s178
    %s195 = sphi 0, %s179
  $region4: #{ffn_forward.1} parent=0 // loop_header_branch
    %16 = sbr.rel (%p14) target = $region8
  $region5: #{ffn_forward.1} parent=0 // loop_body
    %s18 = ssub.s32 %s13, 1
    %s19 = ssub.s32 %s13, 2
    %s20 = sadd.s32 %s13, 1
    %s21 = ssub.s32 %s13, %s20
    %p22 = scmp.eq.s32.totalorder %s21, 0
    %s24 = sadd.s32 %s23, 1
    %s25 = scalar_select %p22, %s23, %s24
    %p28 = pneg %p22
    %p29 = scmp.eq.s32.totalorder %s13, 1
    %p30 = por %p28, %p29
    %p31 = scmp.ne.s32.totalorder %s23, %s26
    %p32 = scmp.eq.s32.totalorder %s13, 0
    %p33 = por %p31, %p32
    %p34 = scmp.ne.s32.totalorder %s23, %s26
    %p35 = scmp.eq.s32.totalorder %s18, 1
    %p36 = por %p34, %p35
    %p37 = scmp.ne.s32.totalorder %s26, %s27
    %p38 = scmp.eq.s32.totalorder %s18, 0
    %p39 = por %p37, %p38
    %p40 = scmp.ne.s32.totalorder %s26, %s27
    %p41 = scmp.eq.s32.totalorder %s19, 1
    %p42 = por %p40, %p41
    %p44 = scmp.ne.s32.totalorder %s27, %s43
    %p45 = scmp.eq.s32.totalorder %s19, 0
    %p46 = por %p44, %p45
    %s48 = sadd.s32 %s47, 1
    %p51 = scmp.eq.s32.totalorder %s13, 1
    %p52 = scmp.ne.s32.totalorder %s47, %s49
    %p53 = scmp.eq.s32.totalorder %s13, 0
    %p54 = por %p52, %p53
    %p55 = scmp.ne.s32.totalorder %s47, %s49
    %p56 = scmp.eq.s32.totalorder %s18, 1
    %p57 = por %p55, %p56
    %p58 = scmp.ne.s32.totalorder %s49, %s50
    %p59 = scmp.eq.s32.totalorder %s18, 0
    %p60 = por %p58, %p59
    %p61 = scmp.ne.s32.totalorder %s49, %s50
    %p62 = scmp.eq.s32.totalorder %s19, 1
    %p63 = por %p61, %p62
    %p65 = scmp.ne.s32.totalorder %s50, %s64
    %p66 = scmp.eq.s32.totalorder %s19, 0
    %p67 = por %p65, %p66
    %s69 = sadd.s32 %s68, 1
    %p72 = scmp.eq.s32.totalorder %s13, 1
    %p73 = scmp.ne.s32.totalorder %s68, %s70
    %p74 = scmp.eq.s32.totalorder %s13, 0
    %p75 = por %p73, %p74
    %p76 = scmp.ne.s32.totalorder %s68, %s70
    %p77 = scmp.eq.s32.totalorder %s18, 1
    %p78 = por %p76, %p77
    %p79 = scmp.ne.s32.totalorder %s70, %s71
    %p80 = scmp.eq.s32.totalorder %s18, 0
    %p81 = por %p79, %p80
    %p82 = scmp.ne.s32.totalorder %s70, %s71
    %p83 = scmp.eq.s32.totalorder %s19, 1
    %p84 = por %p82, %p83
    %p86 = scmp.ne.s32.totalorder %s71, %s85
    %p87 = scmp.eq.s32.totalorder %s19, 0
    %p88 = por %p86, %p87
    %s90 = sadd.s32 %s89, 1
    %p93 = scmp.eq.s32.totalorder %s13, 1
    %p94 = scmp.ne.s32.totalorder %s89, %s91
    %p95 = scmp.eq.s32.totalorder %s13, 0
    %p96 = por %p94, %p95
    %p97 = scmp.ne.s32.totalorder %s89, %s91
    %p98 = scmp.eq.s32.totalorder %s18, 1
    %p99 = por %p97, %p98
    %p100 = scmp.ne.s32.totalorder %s91, %s92
    %p101 = scmp.eq.s32.totalorder %s18, 0
    %p102 = por %p100, %p101
    %p103 = scmp.ne.s32.totalorder %s91, %s92
    %p104 = scmp.eq.s32.totalorder %s19, 1
    %p105 = por %p103, %p104
    %p107 = scmp.ne.s32.totalorder %s92, %s106
    %p108 = scmp.eq.s32.totalorder %s19, 0
    %p109 = por %p107, %p108
    %s111 = sadd.s32 %s110, 1
    %p114 = scmp.eq.s32.totalorder %s13, 1
    %p115 = scmp.ne.s32.totalorder %s110, %s112
    %p116 = scmp.eq.s32.totalorder %s13, 0
    %p117 = por %p115, %p116
    %p118 = scmp.ne.s32.totalorder %s110, %s112
    %p119 = scmp.eq.s32.totalorder %s18, 1
    %p120 = por %p118, %p119
    %p121 = scmp.ne.s32.totalorder %s112, %s113
    %p122 = scmp.eq.s32.totalorder %s18, 0
    %p123 = por %p121, %p122
    %p124 = scmp.ne.s32.totalorder %s112, %s113
    %p125 = scmp.eq.s32.totalorder %s19, 1
    %p126 = por %p124, %p125
    %p128 = scmp.ne.s32.totalorder %s113, %s127
    %p129 = scmp.eq.s32.totalorder %s19, 0
    %p130 = por %p128, %p129
    %s132 = sadd.s32 %s131, 1
    %p135 = scmp.eq.s32.totalorder %s13, 1
    %p136 = scmp.ne.s32.totalorder %s131, %s133
    %p137 = scmp.eq.s32.totalorder %s13, 0
    %p138 = por %p136, %p137
    %p139 = scmp.ne.s32.totalorder %s131, %s133
    %p140 = scmp.eq.s32.totalorder %s18, 1
    %p141 = por %p139, %p140
    %p142 = scmp.ne.s32.totalorder %s133, %s134
    %p143 = scmp.eq.s32.totalorder %s18, 0
    %p144 = por %p142, %p143
    %p145 = scmp.ne.s32.totalorder %s133, %s134
    %p146 = scmp.eq.s32.totalorder %s19, 1
    %p147 = por %p145, %p146
    %p149 = scmp.ne.s32.totalorder %s134, %s148
    %p150 = scmp.eq.s32.totalorder %s19, 0
    %p151 = por %p149, %p150
    %s153 = sadd.s32 %s152, 1
    %p156 = scmp.eq.s32.totalorder %s13, 1
    %p157 = scmp.ne.s32.totalorder %s152, %s154
    %p158 = scmp.eq.s32.totalorder %s13, 0
    %p159 = por %p157, %p158
    %p160 = scmp.ne.s32.totalorder %s152, %s154
    %p161 = scmp.eq.s32.totalorder %s18, 1
    %p162 = por %p160, %p161
    %p163 = scmp.ne.s32.totalorder %s154, %s155
    %p164 = scmp.eq.s32.totalorder %s18, 0
    %p165 = por %p163, %p164
    %p166 = scmp.ne.s32.totalorder %s154, %s155
    %p167 = scmp.eq.s32.totalorder %s19, 1
    %p168 = por %p166, %p167
    %p170 = scmp.ne.s32.totalorder %s155, %s169
    %p171 = scmp.eq.s32.totalorder %s19, 0
    %p172 = por %p170, %p171
    %s173 = ssub.s32 %s13, %s20
    %p174 = scmp.eq.s32.totalorder %s173, 0
    %s176 = sadd.s32 %s175, 1
    %s177 = scalar_select %p174, %s175, %s176
    %p180 = pneg %p174
    %p181 = scmp.eq.s32.totalorder %s13, 1
    %p182 = por %p180, %p181
    %p183 = scmp.ne.s32.totalorder %s175, %s178
    %p184 = scmp.eq.s32.totalorder %s13, 0
    %p185 = por %p183, %p184
    %p186 = scmp.ne.s32.totalorder %s175, %s178
    %p187 = scmp.eq.s32.totalorder %s18, 1
    %p188 = por %p186, %p187
    %p189 = scmp.ne.s32.totalorder %s178, %s179
    %p190 = scmp.eq.s32.totalorder %s18, 0
    %p191 = por %p189, %p190
    %p192 = scmp.ne.s32.totalorder %s178, %s179
    %p193 = scmp.eq.s32.totalorder %s19, 1
    %p194 = por %p192, %p193
    %p196 = scmp.ne.s32.totalorder %s179, %s195
    %p197 = scmp.eq.s32.totalorder %s19, 0
    %p198 = por %p196, %p197
    %p199 = scmp.le.s32.totalorder 1, %s13
    %p200 = scmp.lt.s32.totalorder %s13, 3
    %p201 = pnand %p199, %p200
    %p202 = pneg %p201
    // Predicated region
    $region9: #{ffn_forward.1} parent=5 // pred_check
      _
    $region10: #{ffn_forward.1} parent=5 // pred_check_branch
      %204 = sbr.rel (%p201) target = $region12
    $region11: #{ffn_forward.1} parent=5 // pred_region
      %s205 = ssub.s32 %s13, 1
      // Predicated region
      $region13: #{ffn_forward.1} parent=11 // pred_check
        %p206 = pneg %p60
      $region14: #{ffn_forward.1} parent=11 // pred_check_branch
        %208 = sbr.rel (%p206) target = $region16
      $region15: #{ffn_forward.1} parent=11 // pred_region
        _
      $region16: #{ffn_forward.1} parent=11 // pred_fallthru
        _
      // Predicated region
      $region17: #{ffn_forward.1} parent=11 // pred_check
        %p209 = pneg %p81
      $region18: #{ffn_forward.1} parent=11 // pred_check_branch
        %211 = sbr.rel (%p209) target = $region20
      $region19: #{ffn_forward.1} parent=11 // pred_region
        _
      $region20: #{ffn_forward.1} parent=11 // pred_fallthru
        _
      // Predicated region
      $region21: #{ffn_forward.1} parent=11 // pred_check
        %p212 = pneg %p102
      $region22: #{ffn_forward.1} parent=11 // pred_check_branch
        %214 = sbr.rel (%p212) target = $region24
      $region23: #{ffn_forward.1} parent=11 // pred_region
        _
      $region24: #{ffn_forward.1} parent=11 // pred_fallthru
        _
      // Predicated region
      $region25: #{ffn_forward.1} parent=11 // pred_check
        %p215 = pneg %p123
      $region26: #{ffn_forward.1} parent=11 // pred_check_branch
        %217 = sbr.rel (%p215) target = $region28
      $region27: #{ffn_forward.1} parent=11 // pred_region
        _
      $region28: #{ffn_forward.1} parent=11 // pred_fallthru
        _
      // Predicated region
      $region29: #{ffn_forward.1} parent=11 // pred_check
        %p218 = pneg %p144
      $region30: #{ffn_forward.1} parent=11 // pred_check_branch
        %220 = sbr.rel (%p218) target = $region32
      $region31: #{ffn_forward.1} parent=11 // pred_region
        _
      $region32: #{ffn_forward.1} parent=11 // pred_fallthru
        _
      // Predicated region
      $region33: #{ffn_forward.1} parent=11 // pred_check
        %p221 = pneg %p165
      $region34: #{ffn_forward.1} parent=11 // pred_check_branch
        %223 = sbr.rel (%p221) target = $region36
      $region35: #{ffn_forward.1} parent=11 // pred_region
        _
      $region36: #{ffn_forward.1} parent=11 // pred_fallthru
        _
    $region12: #{ffn_forward.1} parent=5 // pred_fallthru
      _
    %p224 = scmp.lt.s32.totalorder %s13, 2
    // Predicated region
    $region37: #{ffn_forward.1} parent=5 // pred_check
      %p225 = pneg %p224
    $region38: #{ffn_forward.1} parent=5 // pred_check_branch
      %227 = sbr.rel (%p225) target = $region40
    $region39: #{ffn_forward.1} parent=5 // pred_region
      // Predicated region
      $region41: #{ffn_forward.1} parent=39 // pred_check
        %p228 = pneg %p33
      $region42: #{ffn_forward.1} parent=39 // pred_check_branch
        %230 = sbr.rel (%p228) target = $region44
      $region43: #{ffn_forward.1} parent=39 // pred_region
        %p231 = scmp.lt.s32.totalorder %s13, 1
        %s232 = scalar_select %p231, %s13, 1
        %s233 = smul.addr %s232, 54
        %s234 = smul.addr %s233, 4
        %s235 = scalar_lea.vmem %s0, %s234
      $region44: #{ffn_forward.1} parent=39 // pred_fallthru
        _
    $region40: #{ffn_forward.1} parent=5 // pred_fallthru
      _
    %p236 = scmp.le.s32.totalorder 1, %s13
    %p237 = scmp.lt.s32.totalorder %s13, 3
    %p238 = pnand %p236, %p237
    %p239 = pneg %p238
    // Predicated region
    $region45: #{ffn_forward.1} parent=5 // pred_check
      _
    $region46: #{ffn_forward.1} parent=5 // pred_check_branch
      %241 = sbr.rel (%p238) target = $region48
    $region47: #{ffn_forward.1} parent=5 // pred_region
      %s242 = ssub.s32 %s13, 1
      %p243 = scmp.lt.s32.totalorder %s18, 1
      %s244 = scalar_select %p243, %s18, 1
      %s245 = smul.addr %s244, 54
      %s246 = smul.addr %s245, 4
      %s247 = scalar_lea.vmem %s0, %s246
      %p248 = pneg %p39
      %p249 = pneg %p36
      %p250 = pneg %p60
      %p251 = pneg %p57
      %p252 = pneg %p81
      %p253 = pneg %p78
      %p254 = pneg %p102
      %p255 = pneg %p99
      %p256 = pneg %p123
      %p257 = pneg %p120
      %p258 = pneg %p144
      %p259 = pneg %p141
      %p260 = pneg %p165
      %p261 = pneg %p162
      %p262 = pneg %p191
      %p263 = pneg %p188
      %p264 = scmp.lt.s32.totalorder %s18, 1
      %s265 = scalar_select %p264, %s18, 1
      %s266 = smul.addr %s265, 8
      %s267 = smul.addr %s266, 8
      %s268 = scalar_lea.vmem %s7, %s267
      %p269 = scmp.lt.s32.totalorder %s18, 1
      %s270 = scalar_select %p269, %s18, 1
      %s271 = smul.addr %s270, 54
      %s272 = smul.addr %s271, 4
      %s273 = scalar_lea.vmem %s0, %s272
      %p274 = scmp.lt.s32.totalorder %s18, 1
      %s275 = scalar_select %p274, %s18, 1
      %s276 = smul.addr %s275, 8
      %s277 = smul.addr %s276, 8
      %s278 = scalar_lea.vmem %s7, %s277
      %v280 = vld [vmem:[%s273] sm:$0xf]
      %v281 = vld [vmem:[%s273 + $0x4] sm:$0xf]
      %v282 = vld [vmem:[%s273 + $0x8] sm:$0xf]
      %v283 = vld [vmem:[%s273 + $0xc] sm:$0xf]
      %v284 = vld [vmem:[%s273 + $0x10] sm:$0xf]
      %v285 = vld [vmem:[%s273 + $0x14] sm:$0xf]
      %v286 = vld [vmem:[%s273 + $0x18] sm:$0xf]
      %v287 = vld [vmem:[%s273 + $0x1c] sm:$0xf]
      %v288 = vld [vmem:[%s273 + $0x20] sm:$0xf]
      %v289 = vld [vmem:[%s273 + $0x24] sm:$0xf]
      %v290 = vld [vmem:[%s273 + $0x28] sm:$0xf]
      %v291 = vld [vmem:[%s273 + $0x2c] sm:$0xf]
      %v292 = vld [vmem:[%s273 + $0x30] sm:$0xf]
      %v293 = vld [vmem:[%s273 + $0x34] sm:$0xf]
      %v294 = vld [vmem:[%s273 + $0x38] sm:$0xf]
      %v295 = vld [vmem:[%s273 + $0x3c] sm:$0xf]
      %v296 = vld [vmem:[%s273 + $0x40] sm:$0xf]
      %v297 = vld [vmem:[%s273 + $0x44] sm:$0xf]
      %v298 = vld [vmem:[%s273 + $0x48] sm:$0xf]
      %v299 = vld [vmem:[%s273 + $0x4c] sm:$0xf]
      %v300 = vld [vmem:[%s273 + $0x50] sm:$0xf]
      %v301 = vld [vmem:[%s273 + $0x54] sm:$0xf]
      %v302 = vld [vmem:[%s273 + $0x58] sm:$0xf]
      %v303 = vld [vmem:[%s273 + $0x5c] sm:$0xf]
      %v304 = vld [vmem:[%s273 + $0x60] sm:$0xf]
      %v305 = vld [vmem:[%s273 + $0x64] sm:$0xf]
      %v306 = vld [vmem:[%s273 + $0x68] sm:$0xf]
      %v307 = vld [vmem:[%s273 + $0x6c] sm:$0xf]
      %v308 = vld [vmem:[%s273 + $0x70] sm:$0xf]
      %v309 = vld [vmem:[%s273 + $0x74] sm:$0xf]
      %v310 = vld [vmem:[%s273 + $0x78] sm:$0xf]
      %v311 = vld [vmem:[%s273 + $0x7c] sm:$0xf]
      %v312 = vld [vmem:[%s273 + $0x80] sm:$0xf]
      %v313 = vld [vmem:[%s273 + $0x84] sm:$0xf]
      %v314 = vld [vmem:[%s273 + $0x88] sm:$0xf]
      %v315 = vld [vmem:[%s273 + $0x8c] sm:$0xf]
      %v316 = vld [vmem:[%s273 + $0x90] sm:$0xf]
      %v317 = vld [vmem:[%s273 + $0x94] sm:$0xf]
      %v318 = vld [vmem:[%s273 + $0x98] sm:$0xf]
      %v319 = vld [vmem:[%s273 + $0x9c] sm:$0xf]
      %v320 = vld [vmem:[%s273 + $0xa0] sm:$0xf]
      %v321 = vld [vmem:[%s273 + $0xa4] sm:$0xf]
      %v322 = vld [vmem:[%s273 + $0xa8] sm:$0xf]
      %v323 = vld [vmem:[%s273 + $0xac] sm:$0xf]
      %v324 = vld [vmem:[%s273 + $0xb0] sm:$0xf]
      %v325 = vld [vmem:[%s273 + $0xb4] sm:$0xf]
      %v326 = vld [vmem:[%s273 + $0xb8] sm:$0xf]
      %v327 = vld [vmem:[%s273 + $0xbc] sm:$0xf]
      %v328 = vld [vmem:[%s273 + $0xc0] sm:$0xf]
      %v329 = vld [vmem:[%s273 + $0xc4] sm:$0xf]
      %v330 = vld [vmem:[%s273 + $0xc8] sm:$0xf]
      %v331 = vld [vmem:[%s273 + $0xcc] sm:$0xf]
      %v332 = vld [vmem:[%s273 + $0xd0] sm:$0xf]
      %v333 = vld [vmem:[%s273 + $0xd4] sm:$0xf]
      %v334 = vld [vmem:[%s1] sm:$0xf]
      %v335 = vld [vmem:[%s1 + $0x4] sm:$0xf]
      %v336 = vld [vmem:[%s1 + $0x8] sm:$0xf]
      %v337 = vld [vmem:[%s1 + $0xc] sm:$0xf]
      %v338 = vld [vmem:[%s2] sm:$0x1]
      %v340 = vlaneseq
      %v341 = vshrl.u32 %v340, 7
      %v342 = vsub.s32 0, %v341
      %v343 = vrot.slane %v338, %v342
      %v399 = vunpack.c.l.b16 %v280
      %v400 = vunpack.c.l.b16 %v281
      %v401 = vunpack.c.l.b16 %v282
      %v402 = vunpack.c.l.b16 %v283
      %v403 = vunpack.c.l.b16 %v284
      %v404 = vunpack.c.l.b16 %v285
      %v405 = vunpack.c.l.b16 %v286
      %v406 = vunpack.c.l.b16 %v287
      %v407 = vunpack.c.l.b16 %v288
      %v408 = vunpack.c.l.b16 %v289
      %v409 = vunpack.c.l.b16 %v290
      %v410 = vunpack.c.l.b16 %v291
      %v411 = vunpack.c.l.b16 %v292
      %v412 = vunpack.c.l.b16 %v293
      %v413 = vunpack.c.l.b16 %v294
      %v414 = vunpack.c.l.b16 %v295
      %v415 = vunpack.c.l.b16 %v296
      %v416 = vunpack.c.l.b16 %v297
      %v417 = vunpack.c.l.b16 %v298
      %v418 = vunpack.c.l.b16 %v299
      %v419 = vunpack.c.l.b16 %v300
      %v420 = vunpack.c.l.b16 %v301
      %v421 = vunpack.c.l.b16 %v302
      %v422 = vunpack.c.l.b16 %v303
      %v423 = vunpack.c.l.b16 %v304
      %v424 = vunpack.c.l.b16 %v305
      %v425 = vunpack.c.l.b16 %v306
      %v426 = vunpack.c.l.b16 %v307
      %v427 = vunpack.c.l.b16 %v308
      %v428 = vunpack.c.l.b16 %v309
      %v429 = vunpack.c.l.b16 %v310
      %v430 = vunpack.c.l.b16 %v311
      %v431 = vunpack.c.l.b16 %v312
      %v432 = vunpack.c.l.b16 %v313
      %v433 = vunpack.c.l.b16 %v314
      %v434 = vunpack.c.l.b16 %v315
      %v435 = vunpack.c.l.b16 %v316
      %v436 = vunpack.c.l.b16 %v317
      %v437 = vunpack.c.l.b16 %v318
      %v438 = vunpack.c.l.b16 %v319
      %v439 = vunpack.c.l.b16 %v320
      %v440 = vunpack.c.l.b16 %v321
      %v441 = vunpack.c.l.b16 %v322
      %v442 = vunpack.c.l.b16 %v323
      %v443 = vunpack.c.l.b16 %v324
      %v444 = vunpack.c.l.b16 %v325
      %v445 = vunpack.c.l.b16 %v326
      %v446 = vunpack.c.l.b16 %v327
      %v447 = vunpack.c.l.b16 %v328
      %v448 = vunpack.c.l.b16 %v329
      %v449 = vunpack.c.l.b16 %v330
      %v450 = vunpack.c.l.b16 %v331
      %v451 = vunpack.c.l.b16 %v332
      %v452 = vunpack.c.l.b16 %v333
      %v453 = vpack.c.b16 %v400, %v399
      %v454 = vpack.c.b16 %v402, %v401
      %v455 = vpack.c.b16 %v404, %v403
      %v456 = vpack.c.b16 %v406, %v405
      %v457 = vpack.c.b16 %v408, %v407
      %v458 = vpack.c.b16 %v410, %v409
      %v459 = vpack.c.b16 %v412, %v411
      %v460 = vpack.c.b16 %v414, %v413
      %v461 = vpack.c.b16 %v416, %v415
      %v462 = vpack.c.b16 %v418, %v417
      %v463 = vpack.c.b16 %v420, %v419
      %v464 = vpack.c.b16 %v422, %v421
      %v465 = vpack.c.b16 %v424, %v423
      %v466 = vpack.c.b16 %v426, %v425
      %v467 = vpack.c.b16 %v428, %v427
      %v468 = vpack.c.b16 %v430, %v429
      %v469 = vpack.c.b16 %v432, %v431
      %v470 = vpack.c.b16 %v434, %v433
      %v471 = vpack.c.b16 %v436, %v435
      %v472 = vpack.c.b16 %v438, %v437
      %v473 = vpack.c.b16 %v440, %v439
      %v474 = vpack.c.b16 %v442, %v441
      %v475 = vpack.c.b16 %v444, %v443
      %v476 = vpack.c.b16 %v446, %v445
      %v477 = vpack.c.b16 %v448, %v447
      %v478 = vpack.c.b16 %v450, %v449
      %v479 = vpack.c.b16 %v452, %v451
      %v484 = vunpack.c.l.b16 %v334
      %v485 = vunpack.c.l.b16 %v335
      %v486 = vunpack.c.l.b16 %v336
      %v487 = vunpack.c.l.b16 %v337
      %v488 = vpack.c.b16 %v485, %v484
      %v489 = vpack.c.b16 %v487, %v486
      %vm492 = vcmask 261120
      %v494 = vsel %vm492, %v453, 0
      %v497 = vsel %vm492, %v454, 0
      %v500 = vsel %vm492, %v455, 0
      %v503 = vsel %vm492, %v456, 0
      %v506 = vsel %vm492, %v457, 0
      %v509 = vsel %vm492, %v458, 0
      %v512 = vsel %vm492, %v459, 0
      %v515 = vsel %vm492, %v460, 0
      %v518 = vsel %vm492, %v461, 0
      %v521 = vsel %vm492, %v462, 0
      %v524 = vsel %vm492, %v463, 0
      %v527 = vsel %vm492, %v464, 0
      %v530 = vsel %vm492, %v465, 0
      %v533 = vsel %vm492, %v466, 0
      %v536 = vsel %vm492, %v467, 0
      %v539 = vsel %vm492, %v468, 0
      %v542 = vsel %vm492, %v469, 0
      %v545 = vsel %vm492, %v470, 0
      %v548 = vsel %vm492, %v471, 0
      %v551 = vsel %vm492, %v472, 0
      %v554 = vsel %vm492, %v473, 0
      %v557 = vsel %vm492, %v474, 0
      %v560 = vsel %vm492, %v475, 0
      %v563 = vsel %vm492, %v476, 0
      %v566 = vsel %vm492, %v477, 0
      %v569 = vsel %vm492, %v478, 0
      %v572 = vsel %vm492, %v479, 0
      %574 = vmatprep.subr.bf16.mxu0 0
      %575 = vmatpush1.bf16.msra.mxu0 %v488
      %576 = vmatprep.subr.bf16.mxu0 0
      %577 = vmatpush1.bf16.msra.mxu0 %v489
      %578 = vmatprep.subr.bf16.mxu0 0
      %579 = vmatpush1.bf16.msra.mxu0 0
      %580 = vmatprep.subr.bf16.mxu0 0
      %581 = vmatpush1.bf16.msra.mxu0 0
      %582 = vmatprep.subr.bf16.mxu0 0
      %583 = vmatpush1.bf16.msra.mxu0 0
      %584 = vmatprep.subr.bf16.mxu0 0
      %585 = vmatpush1.bf16.msra.mxu0 0
      %586 = vmatprep.subr.bf16.mxu0 0
      %587 = vmatpush1.bf16.msra.mxu0 0
      %588 = vmatprep.subr.bf16.mxu0 0
      %589 = vmatpush1.bf16.msra.mxu0 0
      %590 = vmatprep.subr.bf16.mxu0 0
      %591 = vmatpush1.bf16.msra.mxu0 0
      %592 = vmatprep.subr.bf16.mxu0 0
      %593 = vmatpush1.bf16.msra.mxu0 0
      %594 = vmatprep.subr.bf16.mxu0 0
      %595 = vmatpush1.bf16.msra.mxu0 0
      %596 = vmatprep.subr.bf16.mxu0 0
      %597 = vmatpush1.bf16.msra.mxu0 0
      %598 = vmatprep.subr.bf16.mxu0 0
      %599 = vmatpush1.bf16.msra.mxu0 0
      %600 = vmatprep.subr.bf16.mxu0 0
      %601 = vmatpush1.bf16.msra.mxu0 0
      %602 = vmatprep.subr.bf16.mxu0 0
      %603 = vmatpush1.bf16.msra.mxu0 0
      %604 = vmatprep.subr.bf16.mxu0 0
      %605 = vmatpush1.bf16.msra.mxu0 0
      %606 = vmatprep.mubr.bf16.mxu0 0
      %607 = vmatmul.mubr.bf16.gmra.mrb[0].mxu0 %v494
      %v608 = vpop.f32.mrb[0].mxu0
      %v609 = vadd.f32 %v343, %v608
      %v610 = vpop.f32.mrb[0].mxu0
      %v611 = vpop.f32.mrb[0].mxu0
      %v612 = vadd.f32 %v343, %v611
      %v613 = vpop.f32.mrb[0].mxu0
      %614 = vmatprep.mubr.bf16.mxu0 0
      %615 = vmatmul.mubr.bf16.gmra.mrb[0].mxu0 %v497
      %v616 = vpop.f32.mrb[0].mxu0
      %v617 = vadd.f32 %v343, %v616
      %v618 = vpop.f32.mrb[0].mxu0
      %v619 = vpop.f32.mrb[0].mxu0
      %v620 = vadd.f32 %v343, %v619
      %v621 = vpop.f32.mrb[0].mxu0
      %622 = vmatprep.mubr.bf16.mxu0 0
      %623 = vmatmul.mubr.bf16.gmra.mrb[0].mxu0 %v500
      %v624 = vpop.f32.mrb[0].mxu0
      %v625 = vadd.f32 %v343, %v624
      %v626 = vpop.f32.mrb[0].mxu0
      %v627 = vpop.f32.mrb[0].mxu0
      %v628 = vadd.f32 %v343, %v627
      %v629 = vpop.f32.mrb[0].mxu0
      %630 = vmatprep.mubr.bf16.mxu0 0
      %631 = vmatmul.mubr.bf16.gmra.mrb[0].mxu0 %v503
      %v632 = vpop.f32.mrb[0].mxu0
      %v633 = vadd.f32 %v343, %v632
      %v634 = vpop.f32.mrb[0].mxu0
      %v635 = vpop.f32.mrb[0].mxu0
      %v636 = vadd.f32 %v343, %v635
      %v637 = vpop.f32.mrb[0].mxu0
      %638 = vmatprep.mubr.bf16.mxu0 0
      %639 = vmatmul.mubr.bf16.gmra.mrb[0].mxu0 %v506
      %v640 = vpop.f32.mrb[0].mxu0
      %v641 = vadd.f32 %v343, %v640
      %v642 = vpop.f32.mrb[0].mxu0
      %v643 = vpop.f32.mrb[0].mxu0
      %v644 = vadd.f32 %v343, %v643
      %v645 = vpop.f32.mrb[0].mxu0
      %646 = vmatprep.mubr.bf16.mxu0 0
      %647 = vmatmul.mubr.bf16.gmra.mrb[0].mxu0 %v509
      %v648 = vpop.f32.mrb[0].mxu0
      %v649 = vadd.f32 %v343, %v648
      %v650 = vpop.f32.mrb[0].mxu0
      %v651 = vpop.f32.mrb[0].mxu0
      %v652 = vadd.f32 %v343, %v651
      %v653 = vpop.f32.mrb[0].mxu0
      %654 = vmatprep.mubr.bf16.mxu0 0
      %655 = vmatmul.mubr.bf16.gmra.mrb[0].mxu0 %v512
      %v656 = vpop.f32.mrb[0].mxu0
      %v657 = vadd.f32 %v343, %v656
      %v658 = vpop.f32.mrb[0].mxu0
      %v659 = vpop.f32.mrb[0].mxu0
      %v660 = vadd.f32 %v343, %v659
      %v661 = vpop.f32.mrb[0].mxu0
      %662 = vmatprep.mubr.bf16.mxu0 0
      %663 = vmatmul.mubr.bf16.gmra.mrb[0].mxu0 %v515
      %v664 = vpop.f32.mrb[0].mxu0
      %v665 = vadd.f32 %v343, %v664
      %v666 = vpop.f32.mrb[0].mxu0
      %v667 = vpop.f32.mrb[0].mxu0
      %v668 = vadd.f32 %v343, %v667
      %v669 = vpop.f32.mrb[0].mxu0
      %670 = vmatprep.mubr.bf16.mxu0 0
      %671 = vmatmul.mubr.bf16.gmra.mrb[0].mxu0 %v518
      %v672 = vpop.f32.mrb[0].mxu0
      %v673 = vadd.f32 %v343, %v672
      %v674 = vpop.f32.mrb[0].mxu0
      %v675 = vpop.f32.mrb[0].mxu0
      %v676 = vadd.f32 %v343, %v675
      %v677 = vpop.f32.mrb[0].mxu0
      %678 = vmatprep.mubr.bf16.mxu0 0
      %679 = vmatmul.mubr.bf16.gmra.mrb[0].mxu0 %v521
      %v680 = vpop.f32.mrb[0].mxu0
      %v681 = vadd.f32 %v343, %v680
      %v682 = vpop.f32.mrb[0].mxu0
      %v683 = vpop.f32.mrb[0].mxu0
      %v684 = vadd.f32 %v343, %v683
      %v685 = vpop.f32.mrb[0].mxu0
      %686 = vmatprep.mubr.bf16.mxu0 0
      %687 = vmatmul.mubr.bf16.gmra.mrb[0].mxu0 %v524
      %v688 = vpop.f32.mrb[0].mxu0
      %v689 = vadd.f32 %v343, %v688
      %v690 = vpop.f32.mrb[0].mxu0
      %v691 = vpop.f32.mrb[0].mxu0
      %v692 = vadd.f32 %v343, %v691
      %v693 = vpop.f32.mrb[0].mxu0
      %694 = vmatprep.mubr.bf16.mxu0 0
      %695 = vmatmul.mubr.bf16.gmra.mrb[0].mxu0 %v527
      %v696 = vpop.f32.mrb[0].mxu0
      %v697 = vadd.f32 %v343, %v696
      %v698 = vpop.f32.mrb[0].mxu0
      %v699 = vpop.f32.mrb[0].mxu0
      %v700 = vadd.f32 %v343, %v699
      %v701 = vpop.f32.mrb[0].mxu0
      %702 = vmatprep.mubr.bf16.mxu0 0
      %703 = vmatmul.mubr.bf16.gmra.mrb[0].mxu0 %v530
      %v704 = vpop.f32.mrb[0].mxu0
      %v705 = vadd.f32 %v343, %v704
      %v706 = vpop.f32.mrb[0].mxu0
      %v707 = vpop.f32.mrb[0].mxu0
      %v708 = vadd.f32 %v343, %v707
      %v709 = vpop.f32.mrb[0].mxu0
      %710 = vmatprep.mubr.bf16.mxu0 0
      %711 = vmatmul.mubr.bf16.gmra.mrb[0].mxu0 %v533
      %v712 = vpop.f32.mrb[0].mxu0
      %v713 = vadd.f32 %v343, %v712
      %v714 = vpop.f32.mrb[0].mxu0
      %v715 = vpop.f32.mrb[0].mxu0
      %v716 = vadd.f32 %v343, %v715
      %v717 = vpop.f32.mrb[0].mxu0
      %718 = vmatprep.mubr.bf16.mxu0 0
      %719 = vmatmul.mubr.bf16.gmra.mrb[0].mxu0 %v536
      %v720 = vpop.f32.mrb[0].mxu0
      %v721 = vadd.f32 %v343, %v720
      %v722 = vpop.f32.mrb[0].mxu0
      %v723 = vpop.f32.mrb[0].mxu0
      %v724 = vadd.f32 %v343, %v723
      %v725 = vpop.f32.mrb[0].mxu0
      %726 = vmatprep.mubr.bf16.mxu0 0
      %727 = vmatmul.mubr.bf16.gmra.mrb[0].mxu0 %v539
      %v728 = vpop.f32.mrb[0].mxu0
      %v729 = vadd.f32 %v343, %v728
      %v730 = vpop.f32.mrb[0].mxu0
      %v731 = vpop.f32.mrb[0].mxu0
      %v732 = vadd.f32 %v343, %v731
      %v733 = vpop.f32.mrb[0].mxu0
      %734 = vmatprep.mubr.bf16.mxu0 0
      %735 = vmatmul.mubr.bf16.gmra.mrb[0].mxu0 %v542
      %v736 = vpop.f32.mrb[0].mxu0
      %v737 = vadd.f32 %v343, %v736
      %v738 = vpop.f32.mrb[0].mxu0
      %v739 = vpop.f32.mrb[0].mxu0
      %v740 = vadd.f32 %v343, %v739
      %v741 = vpop.f32.mrb[0].mxu0
      %742 = vmatprep.mubr.bf16.mxu0 0
      %743 = vmatmul.mubr.bf16.gmra.mrb[0].mxu0 %v545
      %v744 = vpop.f32.mrb[0].mxu0
      %v745 = vadd.f32 %v343, %v744
      %v746 = vpop.f32.mrb[0].mxu0
      %v747 = vpop.f32.mrb[0].mxu0
      %v748 = vadd.f32 %v343, %v747
      %v749 = vpop.f32.mrb[0].mxu0
      %750 = vmatprep.mubr.bf16.mxu0 0
      %751 = vmatmul.mubr.bf16.gmra.mrb[0].mxu0 %v548
      %v752 = vpop.f32.mrb[0].mxu0
      %v753 = vadd.f32 %v343, %v752
      %v754 = vpop.f32.mrb[0].mxu0
      %v755 = vpop.f32.mrb[0].mxu0
      %v756 = vadd.f32 %v343, %v755
      %v757 = vpop.f32.mrb[0].mxu0
      %758 = vmatprep.mubr.bf16.mxu0 0
      %759 = vmatmul.mubr.bf16.gmra.mrb[0].mxu0 %v551
      %v760 = vpop.f32.mrb[0].mxu0
      %v761 = vadd.f32 %v343, %v760
      %v762 = vpop.f32.mrb[0].mxu0
      %v763 = vpop.f32.mrb[0].mxu0
      %v764 = vadd.f32 %v343, %v763
      %v765 = vpop.f32.mrb[0].mxu0
      %766 = vmatprep.mubr.bf16.mxu0 0
      %767 = vmatmul.mubr.bf16.gmra.mrb[0].mxu0 %v554
      %v768 = vpop.f32.mrb[0].mxu0
      %v769 = vadd.f32 %v343, %v768
      %v770 = vpop.f32.mrb[0].mxu0
      %v771 = vpop.f32.mrb[0].mxu0
      %v772 = vadd.f32 %v343, %v771
      %v773 = vpop.f32.mrb[0].mxu0
      %774 = vmatprep.mubr.bf16.mxu0 0
      %775 = vmatmul.mubr.bf16.gmra.mrb[0].mxu0 %v557
      %v776 = vpop.f32.mrb[0].mxu0
      %v777 = vadd.f32 %v343, %v776
      %v778 = vpop.f32.mrb[0].mxu0
      %v779 = vpop.f32.mrb[0].mxu0
      %v780 = vadd.f32 %v343, %v779
      %v781 = vpop.f32.mrb[0].mxu0
      %782 = vmatprep.mubr.bf16.mxu0 0
      %783 = vmatmul.mubr.bf16.gmra.mrb[0].mxu0 %v560
      %v784 = vpop.f32.mrb[0].mxu0
      %v785 = vadd.f32 %v343, %v784
      %v786 = vpop.f32.mrb[0].mxu0
      %v787 = vpop.f32.mrb[0].mxu0
      %v788 = vadd.f32 %v343, %v787
      %v789 = vpop.f32.mrb[0].mxu0
      %790 = vmatprep.mubr.bf16.mxu0 0
      %791 = vmatmul.mubr.bf16.gmra.mrb[0].mxu0 %v563
      %v792 = vpop.f32.mrb[0].mxu0
      %v793 = vadd.f32 %v343, %v792
      %v794 = vpop.f32.mrb[0].mxu0
      %v795 = vpop.f32.mrb[0].mxu0
      %v796 = vadd.f32 %v343, %v795
      %v797 = vpop.f32.mrb[0].mxu0
      %798 = vmatprep.mubr.bf16.mxu0 0
      %799 = vmatmul.mubr.bf16.gmra.mrb[0].mxu0 %v566
      %v800 = vpop.f32.mrb[0].mxu0
      %v801 = vadd.f32 %v343, %v800
      %v802 = vpop.f32.mrb[0].mxu0
      %v803 = vpop.f32.mrb[0].mxu0
      %v804 = vadd.f32 %v343, %v803
      %v805 = vpop.f32.mrb[0].mxu0
      %806 = vmatprep.mubr.bf16.mxu0 0
      %807 = vmatmul.mubr.bf16.gmra.mrb[0].mxu0 %v569
      %v808 = vpop.f32.mrb[0].mxu0
      %v809 = vadd.f32 %v343, %v808
      %v810 = vpop.f32.mrb[0].mxu0
      %v811 = vpop.f32.mrb[0].mxu0
      %v812 = vadd.f32 %v343, %v811
      %v813 = vpop.f32.mrb[0].mxu0
      %814 = vmatprep.mubr.bf16.mxu0 0
      %815 = vmatmul.mubr.bf16.gmra.mrb[0].mxu0 %v572
      %v816 = vpop.f32.mrb[0].mxu0
      %v817 = vadd.f32 %v343, %v816
      %v818 = vpop.f32.mrb[0].mxu0
      %v819 = vpop.f32.mrb[0].mxu0
      %v820 = vadd.f32 %v343, %v819
      %v821 = vpop.f32.mrb[0].mxu0
      %822 = vdwg.mxu0
      %vm823 = vcmask 523264
      %824 = vst.msk [vmem:[#allocation2] sm:$0xff] %vm823, %v609
      %825 = vst.msk [vmem:[#allocation2 + $0x8] sm:$0xff] %vm823, %v612
      %826 = vst.msk [vmem:[#allocation2 + $0x10] sm:$0xff] %vm823, %v617
      %827 = vst.msk [vmem:[#allocation2 + $0x18] sm:$0xff] %vm823, %v620
      %828 = vst.msk [vmem:[#allocation2 + $0x20] sm:$0xff] %vm823, %v625
      %829 = vst.msk [vmem:[#allocation2 + $0x28] sm:$0xff] %vm823, %v628
      %830 = vst.msk [vmem:[#allocation2 + $0x30] sm:$0xff] %vm823, %v633
      %831 = vst.msk [vmem:[#allocation2 + $0x38] sm:$0xff] %vm823, %v636
      %832 = vst.msk [vmem:[#allocation2 + $0x40] sm:$0xff] %vm823, %v641
      %833 = vst.msk [vmem:[#allocation2 + $0x48] sm:$0xff] %vm823, %v644
      %834 = vst.msk [vmem:[#allocation2 + $0x50] sm:$0xff] %vm823, %v649
      %835 = vst.msk [vmem:[#allocation2 + $0x58] sm:$0xff] %vm823, %v652
      %836 = vst.msk [vmem:[#allocation2 + $0x60] sm:$0xff] %vm823, %v657
      %837 = vst.msk [vmem:[#allocation2 + $0x68] sm:$0xff] %vm823, %v660
      %838 = vst.msk [vmem:[#allocation2 + $0x70] sm:$0xff] %vm823, %v665
      %839 = vst.msk [vmem:[#allocation2 + $0x78] sm:$0xff] %vm823, %v668
      %840 = vst.msk [vmem:[#allocation2 + $0x80] sm:$0xff] %vm823, %v673
      %841 = vst.msk [vmem:[#allocation2 + $0x88] sm:$0xff] %vm823, %v676
      %842 = vst.msk [vmem:[#allocation2 + $0x90] sm:$0xff] %vm823, %v681
      %843 = vst.msk [vmem:[#allocation2 + $0x98] sm:$0xff] %vm823, %v684
      %844 = vst.msk [vmem:[#allocation2 + $0xa0] sm:$0xff] %vm823, %v689
      %845 = vst.msk [vmem:[#allocation2 + $0xa8] sm:$0xff] %vm823, %v692
      %846 = vst.msk [vmem:[#allocation2 + $0xb0] sm:$0xff] %vm823, %v697
      %847 = vst.msk [vmem:[#allocation2 + $0xb8] sm:$0xff] %vm823, %v700
      %848 = vst.msk [vmem:[#allocation2 + $0xc0] sm:$0xff] %vm823, %v705
      %849 = vst.msk [vmem:[#allocation2 + $0xc8] sm:$0xff] %vm823, %v708
      %850 = vst.msk [vmem:[#allocation2 + $0xd0] sm:$0xff] %vm823, %v713
      %851 = vst.msk [vmem:[#allocation2 + $0xd8] sm:$0xff] %vm823, %v716
      %852 = vst.msk [vmem:[#allocation2 + $0xe0] sm:$0xff] %vm823, %v721
      %853 = vst.msk [vmem:[#allocation2 + $0xe8] sm:$0xff] %vm823, %v724
      %854 = vst.msk [vmem:[#allocation2 + $0xf0] sm:$0xff] %vm823, %v729
      %855 = vst.msk [vmem:[#allocation2 + $0xf8] sm:$0xff] %vm823, %v732
      %856 = vst.msk [vmem:[#allocation2 + $0x100] sm:$0xff] %vm823, %v737
      %857 = vst.msk [vmem:[#allocation2 + $0x108] sm:$0xff] %vm823, %v740
      %858 = vst.msk [vmem:[#allocation2 + $0x110] sm:$0xff] %vm823, %v745
      %859 = vst.msk [vmem:[#allocation2 + $0x118] sm:$0xff] %vm823, %v748
      %860 = vst.msk [vmem:[#allocation2 + $0x120] sm:$0xff] %vm823, %v753
      %861 = vst.msk [vmem:[#allocation2 + $0x128] sm:$0xff] %vm823, %v756
      %862 = vst.msk [vmem:[#allocation2 + $0x130] sm:$0xff] %vm823, %v761
      %863 = vst.msk [vmem:[#allocation2 + $0x138] sm:$0xff] %vm823, %v764
      %864 = vst.msk [vmem:[#allocation2 + $0x140] sm:$0xff] %vm823, %v769
      %865 = vst.msk [vmem:[#allocation2 + $0x148] sm:$0xff] %vm823, %v772
      %866 = vst.msk [vmem:[#allocation2 + $0x150] sm:$0xff] %vm823, %v777
      %867 = vst.msk [vmem:[#allocation2 + $0x158] sm:$0xff] %vm823, %v780
      %868 = vst.msk [vmem:[#allocation2 + $0x160] sm:$0xff] %vm823, %v785
      %869 = vst.msk [vmem:[#allocation2 + $0x168] sm:$0xff] %vm823, %v788
      %870 = vst.msk [vmem:[#allocation2 + $0x170] sm:$0xff] %vm823, %v793
      %871 = vst.msk [vmem:[#allocation2 + $0x178] sm:$0xff] %vm823, %v796
      %872 = vst.msk [vmem:[#allocation2 + $0x180] sm:$0xff] %vm823, %v801
      %873 = vst.msk [vmem:[#allocation2 + $0x188] sm:$0xff] %vm823, %v804
      %874 = vst.msk [vmem:[#allocation2 + $0x190] sm:$0xff] %vm823, %v809
      %875 = vst.msk [vmem:[#allocation2 + $0x198] sm:$0xff] %vm823, %v812
      %876 = vst.msk [vmem:[#allocation2 + $0x1a0] sm:$0xff] %vm823, %v817
      %877 = vst.msk [vmem:[#allocation2 + $0x1a8] sm:$0xff] %vm823, %v820
      %878 = vst.msk [vmem:[#allocation2] sm:$0xff] %vm823, 0.0
      %879 = vst.msk [vmem:[#allocation2 + $0x8] sm:$0xff] %vm823, 0.0
      %880 = vst.msk [vmem:[#allocation2 + $0x10] sm:$0xff] %vm823, 0.0
      %s881 = scalar_lea.vmem [#allocation2], 408
      %882 = vst.msk [vmem:[%s881] sm:$0xff] %vm823, 0.0
      %883 = vst.msk [vmem:[%s881 + $0x8] sm:$0xff] %vm823, 0.0
      %884 = vst.msk [vmem:[%s881 + $0x10] sm:$0xff] %vm823, 0.0
      %vm885 = vcmask 516096
      %886 = vst.msk [vmem:[#allocation2] sm:$0x1] %vm885, 0.0
      %887 = vst.msk [vmem:[#allocation2 + $0x18] sm:$0x1] %vm885, 0.0
      %888 = vst.msk [vmem:[#allocation2 + $0x30] sm:$0x1] %vm885, 0.0
      %889 = vst.msk [vmem:[#allocation2 + $0x48] sm:$0x1] %vm885, 0.0
      %890 = vst.msk [vmem:[#allocation2 + $0x60] sm:$0x1] %vm885, 0.0
      %891 = vst.msk [vmem:[#allocation2 + $0x78] sm:$0x1] %vm885, 0.0
      %892 = vst.msk [vmem:[#allocation2 + $0x90] sm:$0x1] %vm885, 0.0
      %893 = vst.msk [vmem:[#allocation2 + $0xa8] sm:$0x1] %vm885, 0.0
      %894 = vst.msk [vmem:[#allocation2 + $0xc0] sm:$0x1] %vm885, 0.0
      %895 = vst.msk [vmem:[#allocation2 + $0xd8] sm:$0x1] %vm885, 0.0
      %896 = vst.msk [vmem:[#allocation2 + $0xf0] sm:$0x1] %vm885, 0.0
      %897 = vst.msk [vmem:[#allocation2 + $0x108] sm:$0x1] %vm885, 0.0
      %898 = vst.msk [vmem:[#allocation2 + $0x120] sm:$0x1] %vm885, 0.0
      %899 = vst.msk [vmem:[#allocation2 + $0x138] sm:$0x1] %vm885, 0.0
      %900 = vst.msk [vmem:[#allocation2 + $0x150] sm:$0x1] %vm885, 0.0
      %901 = vst.msk [vmem:[#allocation2 + $0x168] sm:$0x1] %vm885, 0.0
      %902 = vst.msk [vmem:[#allocation2 + $0x180] sm:$0x1] %vm885, 0.0
      %903 = vst.msk [vmem:[#allocation2 + $0x198] sm:$0x1] %vm885, 0.0
      %904 = vst.msk [vmem:[#allocation2 + $0x11] sm:$0x1] %vm885, 0.0
      %905 = vst.msk [vmem:[#allocation2 + $0x29] sm:$0x1] %vm885, 0.0
      %906 = vst.msk [vmem:[#allocation2 + $0x41] sm:$0x1] %vm885, 0.0
      %907 = vst.msk [vmem:[#allocation2 + $0x59] sm:$0x1] %vm885, 0.0
      %908 = vst.msk [vmem:[#allocation2 + $0x71] sm:$0x1] %vm885, 0.0
      %909 = vst.msk [vmem:[#allocation2 + $0x89] sm:$0x1] %vm885, 0.0
      %910 = vst.msk [vmem:[#allocation2 + $0xa1] sm:$0x1] %vm885, 0.0
      %911 = vst.msk [vmem:[#allocation2 + $0xb9] sm:$0x1] %vm885, 0.0
      %912 = vst.msk [vmem:[#allocation2 + $0xd1] sm:$0x1] %vm885, 0.0
      %913 = vst.msk [vmem:[#allocation2 + $0xe9] sm:$0x1] %vm885, 0.0
      %914 = vst.msk [vmem:[#allocation2 + $0x101] sm:$0x1] %vm885, 0.0
      %915 = vst.msk [vmem:[#allocation2 + $0x119] sm:$0x1] %vm885, 0.0
      %916 = vst.msk [vmem:[#allocation2 + $0x131] sm:$0x1] %vm885, 0.0
      %917 = vst.msk [vmem:[#allocation2 + $0x149] sm:$0x1] %vm885, 0.0
      %918 = vst.msk [vmem:[#allocation2 + $0x161] sm:$0x1] %vm885, 0.0
      %919 = vst.msk [vmem:[#allocation2 + $0x179] sm:$0x1] %vm885, 0.0
      %920 = vst.msk [vmem:[#allocation2 + $0x191] sm:$0x1] %vm885, 0.0
      %921 = vst.msk [vmem:[#allocation2 + $0x1a9] sm:$0x1] %vm885, 0.0
      %v922 = vld [vmem:[%s3] sm:$0x7]
      %v923 = vld [vmem:[%s3 + $0x4] sm:$0x7]
      %v924 = vld [vmem:[%s3 + $0x8] sm:$0x7]
      %v925 = vld [vmem:[%s4] sm:$0x1]
      %v926 = vld [vmem:[%s5] sm:$0xf]
      %v927 = vld [vmem:[%s5 + $0x4] sm:$0xf]
      %v928 = vld [vmem:[%s5 + $0x8] sm:$0xf]
      %v929 = vld [vmem:[%s5 + $0xc] sm:$0xf]
      %v930 = vld [vmem:[%s6] sm:$0xff]
      %v931 = vld [vmem:[%s6 + $0x8] sm:$0xff]
      %v932 = vld [vmem:[%s6 + $0x10] sm:$0xff]
      %v933 = vld [vmem:[%s6 + $0x18] sm:$0xff]
      %v934 = vld [vmem:[#allocation2] sm:$0xff]
      %v935 = vld [vmem:[#allocation2 + $0x8] sm:$0xff]
      %v936 = vld [vmem:[#allocation2 + $0x18] sm:$0xff]
      %v937 = vld [vmem:[#allocation2 + $0x20] sm:$0xff]
      %v938 = vld [vmem:[#allocation2 + $0x30] sm:$0xff]
      %v939 = vld [vmem:[#allocation2 + $0x38] sm:$0xff]
      %v940 = vld [vmem:[#allocation2 + $0x48] sm:$0xff]
      %v941 = vld [vmem:[#allocation2 + $0x50] sm:$0xff]
      %v942 = vld [vmem:[#allocation2 + $0x60] sm:$0xff]
      %v943 = vld [vmem:[#allocation2 + $0x68] sm:$0xff]
      %v944 = vld [vmem:[#allocation2 + $0x78] sm:$0xff]
      %v945 = vld [vmem:[#allocation2 + $0x80] sm:$0xff]
      %v946 = vld [vmem:[#allocation2 + $0x90] sm:$0xff]
      %v947 = vld [vmem:[#allocation2 + $0x98] sm:$0xff]
      %v948 = vld [vmem:[#allocation2 + $0xa8] sm:$0xff]
      %v949 = vld [vmem:[#allocation2 + $0xb0] sm:$0xff]
      %v950 = vld [vmem:[#allocation2 + $0xc0] sm:$0xff]
      %v951 = vld [vmem:[#allocation2 + $0xc8] sm:$0xff]
      %v952 = vld [vmem:[#allocation2 + $0xd8] sm:$0xff]
      %v953 = vld [vmem:[#allocation2 + $0xe0] sm:$0xff]
      %v954 = vlaneseq
      %v955 = vshrl.u32 %v954, 7
      %v956 = vsub.s32 0, %v955
      %v957 = vrot.slane %v922, %v956
      %v958 = vmul.f32 %v934, %v957
      %v959 = vmul.f32 %v935, %v957
      %v960 = vmul.f32 %v936, %v957
      %v961 = vmul.f32 %v937, %v957
      %v962 = vmul.f32 %v938, %v957
      %v963 = vmul.f32 %v939, %v957
      %v964 = vmul.f32 %v940, %v957
      %v965 = vmul.f32 %v941, %v957
      %v966 = vmul.f32 %v942, %v957
      %v967 = vmul.f32 %v943, %v957
      %v968 = vmul.f32 %v944, %v957
      %v969 = vmul.f32 %v945, %v957
      %v970 = vmul.f32 %v946, %v957
      %v971 = vmul.f32 %v947, %v957
      %v972 = vmul.f32 %v948, %v957
      %v973 = vmul.f32 %v949, %v957
      %v974 = vadd.f32 %v958, 0.0
      %v975 = vadd.f32 %v959, 0.0
      %v976 = vadd.f32 %v960, 0.0
      %v977 = vadd.f32 %v961, 0.0
      %v978 = vadd.f32 %v962, 0.0
      %v979 = vadd.f32 %v963, 0.0
      %v980 = vadd.f32 %v964, 0.0
      %v981 = vadd.f32 %v965, 0.0
      %v982 = vadd.f32 %v966, 0.0
      %v983 = vadd.f32 %v967, 0.0
      %v984 = vadd.f32 %v968, 0.0
      %v985 = vadd.f32 %v969, 0.0
      %v986 = vadd.f32 %v970, 0.0
      %v987 = vadd.f32 %v971, 0.0
      %v988 = vadd.f32 %v972, 0.0
      %v989 = vadd.f32 %v973, 0.0
      %v990 = vlaneseq
      %v991 = vshrl.u32 %v990, 7
      %v992 = vsub.s32 0, %v991
      %v993 = vrot.slane %v923, %v992
      %v994 = vmul.f32 %v936, %v993
      %v995 = vmul.f32 %v937, %v993
      %v996 = vmul.f32 %v938, %v993
      %v997 = vmul.f32 %v939, %v993
      %v998 = vmul.f32 %v940, %v993
      %v999 = vmul.f32 %v941, %v993
      %v1000 = vmul.f32 %v942, %v993
      %v1001 = vmul.f32 %v943, %v993
      %v1002 = vmul.f32 %v944, %v993
      %v1003 = vmul.f32 %v945, %v993
      %v1004 = vmul.f32 %v946, %v993
      %v1005 = vmul.f32 %v947, %v993
      %v1006 = vmul.f32 %v948, %v993
      %v1007 = vmul.f32 %v949, %v993
      %v1008 = vmul.f32 %v950, %v993
      %v1009 = vmul.f32 %v951, %v993
      %v1010 = vadd.f32 %v974, %v994
      %v1011 = vadd.f32 %v975, %v995
      %v1012 = vadd.f32 %v976, %v996
      %v1013 = vadd.f32 %v977, %v997
      %v1014 = vadd.f32 %v978, %v998
      %v1015 = vadd.f32 %v979, %v999
      %v1016 = vadd.f32 %v980, %v1000
      %v1017 = vadd.f32 %v981, %v1001
      %v1018 = vadd.f32 %v982, %v1002
      %v1019 = vadd.f32 %v983, %v1003
      %v1020 = vadd.f32 %v984, %v1004
      %v1021 = vadd.f32 %v985, %v1005
      %v1022 = vadd.f32 %v986, %v1006
      %v1023 = vadd.f32 %v987, %v1007
      %v1024 = vadd.f32 %v988, %v1008
      %v1025 = vadd.f32 %v989, %v1009
      %v1026 = vlaneseq
      %v1027 = vshrl.u32 %v1026, 7
      %v1028 = vsub.s32 0, %v1027
      %v1029 = vrot.slane %v924, %v1028
      %v1030 = vmul.f32 %v938, %v1029
      %v1031 = vmul.f32 %v939, %v1029
      %v1032 = vmul.f32 %v940, %v1029
      %v1033 = vmul.f32 %v941, %v1029
      %v1034 = vmul.f32 %v942, %v1029
      %v1035 = vmul.f32 %v943, %v1029
      %v1036 = vmul.f32 %v944, %v1029
      %v1037 = vmul.f32 %v945, %v1029
      %v1038 = vmul.f32 %v946, %v1029
      %v1039 = vmul.f32 %v947, %v1029
      %v1040 = vmul.f32 %v948, %v1029
      %v1041 = vmul.f32 %v949, %v1029
      %v1042 = vmul.f32 %v950, %v1029
      %v1043 = vmul.f32 %v951, %v1029
      %v1044 = vmul.f32 %v952, %v1029
      %v1045 = vmul.f32 %v953, %v1029
      %v1046 = vadd.f32 %v1010, %v1030
      %v1047 = vadd.f32 %v1011, %v1031
      %v1048 = vadd.f32 %v1012, %v1032
      %v1049 = vadd.f32 %v1013, %v1033
      %v1050 = vadd.f32 %v1014, %v1034
      %v1051 = vadd.f32 %v1015, %v1035
      %v1052 = vadd.f32 %v1016, %v1036
      %v1053 = vadd.f32 %v1017, %v1037
      %v1054 = vadd.f32 %v1018, %v1038
      %v1055 = vadd.f32 %v1019, %v1039
      %v1056 = vadd.f32 %v1020, %v1040
      %v1057 = vadd.f32 %v1021, %v1041
      %v1058 = vadd.f32 %v1022, %v1042
      %v1059 = vadd.f32 %v1023, %v1043
      %v1060 = vadd.f32 %v1024, %v1044
      %v1061 = vadd.f32 %v1025, %v1045
      %v1062 = vld [vmem:[#allocation2 + $0x1] sm:$0xff]
      %v1063 = vld [vmem:[#allocation2 + $0x9] sm:$0xff]
      %v1064 = vld [vmem:[#allocation2 + $0x19] sm:$0xff]
      %v1065 = vld [vmem:[#allocation2 + $0x21] sm:$0xff]
      %v1066 = vld [vmem:[#allocation2 + $0x31] sm:$0xff]
      %v1067 = vld [vmem:[#allocation2 + $0x39] sm:$0xff]
      %v1068 = vld [vmem:[#allocation2 + $0x49] sm:$0xff]
      %v1069 = vld [vmem:[#allocation2 + $0x51] sm:$0xff]
      %v1070 = vld [vmem:[#allocation2 + $0x61] sm:$0xff]
      %v1071 = vld [vmem:[#allocation2 + $0x69] sm:$0xff]
      %v1072 = vld [vmem:[#allocation2 + $0x79] sm:$0xff]
      %v1073 = vld [vmem:[#allocation2 + $0x81] sm:$0xff]
      %v1074 = vld [vmem:[#allocation2 + $0x91] sm:$0xff]
      %v1075 = vld [vmem:[#allocation2 + $0x99] sm:$0xff]
      %v1076 = vld [vmem:[#allocation2 + $0xa9] sm:$0xff]
      %v1077 = vld [vmem:[#allocation2 + $0xb1] sm:$0xff]
      %v1078 = vld [vmem:[#allocation2 + $0xc1] sm:$0xff]
      %v1079 = vld [vmem:[#allocation2 + $0xc9] sm:$0xff]
      %v1080 = vld [vmem:[#allocation2 + $0xd9] sm:$0xff]
      %v1081 = vld [vmem:[#allocation2 + $0xe1] sm:$0xff]
      %v1082 = vlaneseq
      %v1083 = vshrl.u32 %v1082, 7
      %v1084 = vsub.s32 1, %v1083
      %v1085 = vrot.slane %v922, %v1084
      %v1086 = vmul.f32 %v1062, %v1085
      %v1087 = vmul.f32 %v1063, %v1085
      %v1088 = vmul.f32 %v1064, %v1085
      %v1089 = vmul.f32 %v1065, %v1085
      %v1090 = vmul.f32 %v1066, %v1085
      %v1091 = vmul.f32 %v1067, %v1085
      %v1092 = vmul.f32 %v1068, %v1085
      %v1093 = vmul.f32 %v1069, %v1085
      %v1094 = vmul.f32 %v1070, %v1085
      %v1095 = vmul.f32 %v1071, %v1085
      %v1096 = vmul.f32 %v1072, %v1085
      %v1097 = vmul.f32 %v1073, %v1085
      %v1098 = vmul.f32 %v1074, %v1085
      %v1099 = vmul.f32 %v1075, %v1085
      %v1100 = vmul.f32 %v1076, %v1085
      %v1101 = vmul.f32 %v1077, %v1085
      %v1102 = vadd.f32 %v1046, %v1086
      %v1103 = vadd.f32 %v1047, %v1087
      %v1104 = vadd.f32 %v1048, %v1088
      %v1105 = vadd.f32 %v1049, %v1089
      %v1106 = vadd.f32 %v1050, %v1090
      %v1107 = vadd.f32 %v1051, %v1091
      %v1108 = vadd.f32 %v1052, %v1092
      %v1109 = vadd.f32 %v1053, %v1093
      %v1110 = vadd.f32 %v1054, %v1094
      %v1111 = vadd.f32 %v1055, %v1095
      %v1112 = vadd.f32 %v1056, %v1096
      %v1113 = vadd.f32 %v1057, %v1097
      %v1114 = vadd.f32 %v1058, %v1098
      %v1115 = vadd.f32 %v1059, %v1099
      %v1116 = vadd.f32 %v1060, %v1100
      %v1117 = vadd.f32 %v1061, %v1101
      %v1118 = vlaneseq
      %v1119 = vshrl.u32 %v1118, 7
      %v1120 = vsub.s32 1, %v1119
      %v1121 = vrot.slane %v923, %v1120
      %v1122 = vmul.f32 %v1064, %v1121
      %v1123 = vmul.f32 %v1065, %v1121
      %v1124 = vmul.f32 %v1066, %v1121
      %v1125 = vmul.f32 %v1067, %v1121
      %v1126 = vmul.f32 %v1068, %v1121
      %v1127 = vmul.f32 %v1069, %v1121
      %v1128 = vmul.f32 %v1070, %v1121
      %v1129 = vmul.f32 %v1071, %v1121
      %v1130 = vmul.f32 %v1072, %v1121
      %v1131 = vmul.f32 %v1073, %v1121
      %v1132 = vmul.f32 %v1074, %v1121
      %v1133 = vmul.f32 %v1075, %v1121
      %v1134 = vmul.f32 %v1076, %v1121
      %v1135 = vmul.f32 %v1077, %v1121
      %v1136 = vmul.f32 %v1078, %v1121
      %v1137 = vmul.f32 %v1079, %v1121
      %v1138 = vadd.f32 %v1102, %v1122
      %v1139 = vadd.f32 %v1103, %v1123
      %v1140 = vadd.f32 %v1104, %v1124
      %v1141 = vadd.f32 %v1105, %v1125
      %v1142 = vadd.f32 %v1106, %v1126
      %v1143 = vadd.f32 %v1107, %v1127
      %v1144 = vadd.f32 %v1108, %v1128
      %v1145 = vadd.f32 %v1109, %v1129
      %v1146 = vadd.f32 %v1110, %v1130
      %v1147 = vadd.f32 %v1111, %v1131
      %v1148 = vadd.f32 %v1112, %v1132
      %v1149 = vadd.f32 %v1113, %v1133
      %v1150 = vadd.f32 %v1114, %v1134
      %v1151 = vadd.f32 %v1115, %v1135
      %v1152 = vadd.f32 %v1116, %v1136
      %v1153 = vadd.f32 %v1117, %v1137
      %v1154 = vlaneseq
      %v1155 = vshrl.u32 %v1154, 7
      %v1156 = vsub.s32 1, %v1155
      %v1157 = vrot.slane %v924, %v1156
      %v1158 = vmul.f32 %v1066, %v1157
      %v1159 = vmul.f32 %v1067, %v1157
      %v1160 = vmul.f32 %v1068, %v1157
      %v1161 = vmul.f32 %v1069, %v1157
      %v1162 = vmul.f32 %v1070, %v1157
      %v1163 = vmul.f32 %v1071, %v1157
      %v1164 = vmul.f32 %v1072, %v1157
      %v1165 = vmul.f32 %v1073, %v1157
      %v1166 = vmul.f32 %v1074, %v1157
      %v1167 = vmul.f32 %v1075, %v1157
      %v1168 = vmul.f32 %v1076, %v1157
      %v1169 = vmul.f32 %v1077, %v1157
      %v1170 = vmul.f32 %v1078, %v1157
      %v1171 = vmul.f32 %v1079, %v1157
      %v1172 = vmul.f32 %v1080, %v1157
      %v1173 = vmul.f32 %v1081, %v1157
      %v1174 = vadd.f32 %v1138, %v1158
      %v1175 = vadd.f32 %v1139, %v1159
      %v1176 = vadd.f32 %v1140, %v1160
      %v1177 = vadd.f32 %v1141, %v1161
      %v1178 = vadd.f32 %v1142, %v1162
      %v1179 = vadd.f32 %v1143, %v1163
      %v1180 = vadd.f32 %v1144, %v1164
      %v1181 = vadd.f32 %v1145, %v1165
      %v1182 = vadd.f32 %v1146, %v1166
      %v1183 = vadd.f32 %v1147, %v1167
      %v1184 = vadd.f32 %v1148, %v1168
      %v1185 = vadd.f32 %v1149, %v1169
      %v1186 = vadd.f32 %v1150, %v1170
      %v1187 = vadd.f32 %v1151, %v1171
      %v1188 = vadd.f32 %v1152, %v1172
      %v1189 = vadd.f32 %v1153, %v1173
      %v1190 = vld [vmem:[#allocation2 + $0x2] sm:$0xff]
      %v1191 = vld [vmem:[#allocation2 + $0xa] sm:$0xff]
      %v1192 = vld [vmem:[#allocation2 + $0x1a] sm:$0xff]
      %v1193 = vld [vmem:[#allocation2 + $0x22] sm:$0xff]
      %v1194 = vld [vmem:[#allocation2 + $0x32] sm:$0xff]
      %v1195 = vld [vmem:[#allocation2 + $0x3a] sm:$0xff]
      %v1196 = vld [vmem:[#allocation2 + $0x4a] sm:$0xff]
      %v1197 = vld [vmem:[#allocation2 + $0x52] sm:$0xff]
      %v1198 = vld [vmem:[#allocation2 + $0x62] sm:$0xff]
      %v1199 = vld [vmem:[#allocation2 + $0x6a] sm:$0xff]
      %v1200 = vld [vmem:[#allocation2 + $0x7a] sm:$0xff]
      %v1201 = vld [vmem:[#allocation2 + $0x82] sm:$0xff]
      %v1202 = vld [vmem:[#allocation2 + $0x92] sm:$0xff]
      %v1203 = vld [vmem:[#allocation2 + $0x9a] sm:$0xff]
      %v1204 = vld [vmem:[#allocation2 + $0xaa] sm:$0xff]
      %v1205 = vld [vmem:[#allocation2 + $0xb2] sm:$0xff]
      %v1206 = vld [vmem:[#allocation2 + $0xc2] sm:$0xff]
      %v1207 = vld [vmem:[#allocation2 + $0xca] sm:$0xff]
      %v1208 = vld [vmem:[#allocation2 + $0xda] sm:$0xff]
      %v1209 = vld [vmem:[#allocation2 + $0xe2] sm:$0xff]
      %v1210 = vlaneseq
      %v1211 = vshrl.u32 %v1210, 7
      %v1212 = vsub.s32 2, %v1211
      %v1213 = vrot.slane %v922, %v1212
      %v1214 = vmul.f32 %v1190, %v1213
      %v1215 = vmul.f32 %v1191, %v1213
      %v1216 = vmul.f32 %v1192, %v1213
      %v1217 = vmul.f32 %v1193, %v1213
      %v1218 = vmul.f32 %v1194, %v1213
      %v1219 = vmul.f32 %v1195, %v1213
      %v1220 = vmul.f32 %v1196, %v1213
      %v1221 = vmul.f32 %v1197, %v1213
      %v1222 = vmul.f32 %v1198, %v1213
      %v1223 = vmul.f32 %v1199, %v1213
      %v1224 = vmul.f32 %v1200, %v1213
      %v1225 = vmul.f32 %v1201, %v1213
      %v1226 = vmul.f32 %v1202, %v1213
      %v1227 = vmul.f32 %v1203, %v1213
      %v1228 = vmul.f32 %v1204, %v1213
      %v1229 = vmul.f32 %v1205, %v1213
      %v1230 = vadd.f32 %v1174, %v1214
      %v1231 = vadd.f32 %v1175, %v1215
      %v1232 = vadd.f32 %v1176, %v1216
      %v1233 = vadd.f32 %v1177, %v1217
      %v1234 = vadd.f32 %v1178, %v1218
      %v1235 = vadd.f32 %v1179, %v1219
      %v1236 = vadd.f32 %v1180, %v1220
      %v1237 = vadd.f32 %v1181, %v1221
      %v1238 = vadd.f32 %v1182, %v1222
      %v1239 = vadd.f32 %v1183, %v1223
      %v1240 = vadd.f32 %v1184, %v1224
      %v1241 = vadd.f32 %v1185, %v1225
      %v1242 = vadd.f32 %v1186, %v1226
      %v1243 = vadd.f32 %v1187, %v1227
      %v1244 = vadd.f32 %v1188, %v1228
      %v1245 = vadd.f32 %v1189, %v1229
      %v1246 = vlaneseq
      %v1247 = vshrl.u32 %v1246, 7
      %v1248 = vsub.s32 2, %v1247
      %v1249 = vrot.slane %v923, %v1248
      %v1250 = vmul.f32 %v1192, %v1249
      %v1251 = vmul.f32 %v1193, %v1249
      %v1252 = vmul.f32 %v1194, %v1249
      %v1253 = vmul.f32 %v1195, %v1249
      %v1254 = vmul.f32 %v1196, %v1249
      %v1255 = vmul.f32 %v1197, %v1249
      %v1256 = vmul.f32 %v1198, %v1249
      %v1257 = vmul.f32 %v1199, %v1249
      %v1258 = vmul.f32 %v1200, %v1249
      %v1259 = vmul.f32 %v1201, %v1249
      %v1260 = vmul.f32 %v1202, %v1249
      %v1261 = vmul.f32 %v1203, %v1249
      %v1262 = vmul.f32 %v1204, %v1249
      %v1263 = vmul.f32 %v1205, %v1249
      %v1264 = vmul.f32 %v1206, %v1249
      %v1265 = vmul.f32 %v1207, %v1249
      %v1266 = vadd.f32 %v1230, %v1250
      %v1267 = vadd.f32 %v1231, %v1251
      %v1268 = vadd.f32 %v1232, %v1252
      %v1269 = vadd.f32 %v1233, %v1253
      %v1270 = vadd.f32 %v1234, %v1254
      %v1271 = vadd.f32 %v1235, %v1255
      %v1272 = vadd.f32 %v1236, %v1256
      %v1273 = vadd.f32 %v1237, %v1257
      %v1274 = vadd.f32 %v1238, %v1258
      %v1275 = vadd.f32 %v1239, %v1259
      %v1276 = vadd.f32 %v1240, %v1260
      %v1277 = vadd.f32 %v1241, %v1261
      %v1278 = vadd.f32 %v1242, %v1262
      %v1279 = vadd.f32 %v1243, %v1263
      %v1280 = vadd.f32 %v1244, %v1264
      %v1281 = vadd.f32 %v1245, %v1265
      %v1282 = vlaneseq
      %v1283 = vshrl.u32 %v1282, 7
      %v1284 = vsub.s32 2, %v1283
      %v1285 = vrot.slane %v924, %v1284
      %v1286 = vmul.f32 %v1194, %v1285
      %v1287 = vmul.f32 %v1195, %v1285
      %v1288 = vmul.f32 %v1196, %v1285
      %v1289 = vmul.f32 %v1197, %v1285
      %v1290 = vmul.f32 %v1198, %v1285
      %v1291 = vmul.f32 %v1199, %v1285
      %v1292 = vmul.f32 %v1200, %v1285
      %v1293 = vmul.f32 %v1201, %v1285
      %v1294 = vmul.f32 %v1202, %v1285
      %v1295 = vmul.f32 %v1203, %v1285
      %v1296 = vmul.f32 %v1204, %v1285
      %v1297 = vmul.f32 %v1205, %v1285
      %v1298 = vmul.f32 %v1206, %v1285
      %v1299 = vmul.f32 %v1207, %v1285
      %v1300 = vmul.f32 %v1208, %v1285
      %v1301 = vmul.f32 %v1209, %v1285
      %v1302 = vadd.f32 %v1266, %v1286
      %v1303 = vadd.f32 %v1267, %v1287
      %v1304 = vadd.f32 %v1268, %v1288
      %v1305 = vadd.f32 %v1269, %v1289
      %v1306 = vadd.f32 %v1270, %v1290
      %v1307 = vadd.f32 %v1271, %v1291
      %v1308 = vadd.f32 %v1272, %v1292
      %v1309 = vadd.f32 %v1273, %v1293
      %v1310 = vadd.f32 %v1274, %v1294
      %v1311 = vadd.f32 %v1275, %v1295
      %v1312 = vadd.f32 %v1276, %v1296
      %v1313 = vadd.f32 %v1277, %v1297
      %v1314 = vadd.f32 %v1278, %v1298
      %v1315 = vadd.f32 %v1279, %v1299
      %v1316 = vadd.f32 %v1280, %v1300
      %v1317 = vadd.f32 %v1281, %v1301
      %v1319 = vlaneseq
      %v1320 = vshrl.u32 %v1319, 7
      %v1321 = vsub.s32 0, %v1320
      %v1322 = vrot.slane %v925, %v1321
      %v1324 = vadd.f32 %v1302, %v1322
      %v1325 = vadd.f32 %v1303, %v1322
      %v1326 = vadd.f32 %v1304, %v1322
      %v1327 = vadd.f32 %v1305, %v1322
      %v1328 = vadd.f32 %v1306, %v1322
      %v1329 = vadd.f32 %v1307, %v1322
      %v1330 = vadd.f32 %v1308, %v1322
      %v1331 = vadd.f32 %v1309, %v1322
      %v1332 = vadd.f32 %v1310, %v1322
      %v1333 = vadd.f32 %v1311, %v1322
      %v1334 = vadd.f32 %v1312, %v1322
      %v1335 = vadd.f32 %v1313, %v1322
      %v1336 = vadd.f32 %v1314, %v1322
      %v1337 = vadd.f32 %v1315, %v1322
      %v1338 = vadd.f32 %v1316, %v1322
      %v1339 = vadd.f32 %v1317, %v1322
      %v1340 = vmax.f32 %v1324, 0.0
      %v1341 = vmax.f32 %v1325, 0.0
      %v1342 = vmax.f32 %v1326, 0.0
      %v1343 = vmax.f32 %v1327, 0.0
      %v1344 = vmax.f32 %v1328, 0.0
      %v1345 = vmax.f32 %v1329, 0.0
      %v1346 = vmax.f32 %v1330, 0.0
      %v1347 = vmax.f32 %v1331, 0.0
      %v1348 = vmax.f32 %v1332, 0.0
      %v1349 = vmax.f32 %v1333, 0.0
      %v1350 = vmax.f32 %v1334, 0.0
      %v1351 = vmax.f32 %v1335, 0.0
      %v1352 = vmax.f32 %v1336, 0.0
      %v1353 = vmax.f32 %v1337, 0.0
      %v1354 = vmax.f32 %v1338, 0.0
      %v1355 = vmax.f32 %v1339, 0.0
      %v1356 = vpack.c.bf16 %v1341, %v1340
      %v1357 = vpack.c.bf16 %v1343, %v1342
      %v1358 = vpack.c.bf16 %v1345, %v1344
      %v1359 = vpack.c.bf16 %v1347, %v1346
      %v1360 = vpack.c.bf16 %v1349, %v1348
      %v1361 = vpack.c.bf16 %v1351, %v1350
      %v1362 = vpack.c.bf16 %v1353, %v1352
      %v1363 = vpack.c.bf16 %v1355, %v1354
      %1365 = vset.pattern.permute.xlu0 0
      %1366 = vperm.xlu0 %1365, %v930
      %v1367 = vpop.permute.xlu0 %1366
      %1370 = vset.pattern.permute.xlu0 0
      %1371 = vperm.xlu0 %1370, %v931
      %v1372 = vpop.permute.xlu0 %1371
      %1375 = vset.pattern.permute.xlu0 0
      %1376 = vperm.xlu0 %1375, %v932
      %v1377 = vpop.permute.xlu0 %1376
      %1380 = vset.pattern.permute.xlu0 0
      %1381 = vperm.xlu0 %1380, %v933
      %v1382 = vpop.permute.xlu0 %1381
      %v1388 = vunpack.c.l.b16 %v926
      %v1389 = vunpack.c.l.b16 %v927
      %v1390 = vunpack.c.l.b16 %v928
      %v1391 = vunpack.c.l.b16 %v929
      %v1392 = vpack.c.b16 %v1389, %v1388
      %v1393 = vpack.c.b16 %v1391, %v1390
      %v1395 = vsel %vm823, %v1392, 0
      %v1398 = vsel %vm823, %v1393, 0
      %v1401 = vsel %vm823, %v1356, 0
      %v1404 = vsel %vm823, %v1357, 0
      %v1407 = vsel %vm823, %v1358, 0
      %v1410 = vsel %vm823, %v1359, 0
      %v1413 = vsel %vm823, %v1360, 0
      %v1416 = vsel %vm823, %v1361, 0
      %v1419 = vsel %vm823, %v1362, 0
      %v1422 = vsel %vm823, %v1363, 0
      %1424 = vmatprep.subr.bf16.mxu0 0
      %1425 = vmatpush1.bf16.xpose.msra.mxu0 %v1401
      %1426 = vmatprep.subr.bf16.mxu0 0
      %1427 = vmatpush1.bf16.xpose.msra.mxu0 %v1404
      %1428 = vmatprep.subr.bf16.mxu0 0
      %1429 = vmatpush1.bf16.xpose.msra.mxu0 %v1407
      %1430 = vmatprep.subr.bf16.mxu0 0
      %1431 = vmatpush1.bf16.xpose.msra.mxu0 %v1410
      %1432 = vmatprep.subr.bf16.mxu0 0
      %1433 = vmatpush1.bf16.xpose.msra.mxu0 %v1413
      %1434 = vmatprep.subr.bf16.mxu0 0
      %1435 = vmatpush1.bf16.xpose.msra.mxu0 %v1416
      %1436 = vmatprep.subr.bf16.mxu0 0
      %1437 = vmatpush1.bf16.xpose.msra.mxu0 %v1419
      %1438 = vmatprep.subr.bf16.mxu0 0
      %1439 = vmatpush1.bf16.xpose.msra.mxu0 %v1422
      %1440 = vmatprep.subr.bf16.mxu0 0
      %1441 = vmatpush1.bf16.xpose.msra.mxu0 0
      %1442 = vmatprep.subr.bf16.mxu0 0
      %1443 = vmatpush1.bf16.xpose.msra.mxu0 0
      %1444 = vmatprep.subr.bf16.mxu0 0
      %1445 = vmatpush1.bf16.xpose.msra.mxu0 0
      %1446 = vmatprep.subr.bf16.mxu0 0
      %1447 = vmatpush1.bf16.xpose.msra.mxu0 0
      %1448 = vmatprep.subr.bf16.mxu0 0
      %1449 = vmatpush1.bf16.xpose.msra.mxu0 0
      %1450 = vmatprep.subr.bf16.mxu0 0
      %1451 = vmatpush1.bf16.xpose.msra.mxu0 0
      %1452 = vmatprep.subr.bf16.mxu0 0
      %1453 = vmatpush1.bf16.xpose.msra.mxu0 0
      %1454 = vmatprep.subr.bf16.mxu0 0
      %1455 = vmatpush1.bf16.xpose.msra.mxu0 0
      %1456 = vmatprep.mubr.bf16.mxu0 0
      %1457 = vmatmul.mubr.bf16.gmra.mrb[0].mxu0 %v1395
      %v1458 = vpop.f32.mrb[0].mxu0
      %v1459 = vadd.f32 %v1367, %v1458
      %v1460 = vpop.f32.mrb[0].mxu0
      %v1461 = vpop.f32.mrb[0].mxu0
      %v1462 = vadd.f32 %v1372, %v1461
      %v1463 = vpop.f32.mrb[0].mxu0
      %1464 = vmatprep.mubr.bf16.mxu0 0
      %1465 = vmatmul.mubr.bf16.gmra.mrb[0].mxu0 %v1398
      %v1466 = vpop.f32.mrb[0].mxu0
      %v1467 = vadd.f32 %v1377, %v1466
      %v1468 = vpop.f32.mrb[0].mxu0
      %v1469 = vpop.f32.mrb[0].mxu0
      %v1470 = vadd.f32 %v1382, %v1469
      %v1471 = vpop.f32.mrb[0].mxu0
      %1472 = vdwg.mxu0
      %1473 = vst [vmem:[%s278] sm:$0xff] %v1459
      %1474 = vst [vmem:[%s278 + $0x10] sm:$0xff] %v1462
      %1475 = vst [vmem:[%s278 + $0x20] sm:$0xff] %v1467
      %1476 = vst [vmem:[%s278 + $0x30] sm:$0xff] %v1470
      %s1477 = scalar_lea.vmem [#allocation2], 192
      %v1478 = vld [vmem:[%s1477] sm:$0xff]
      %v1479 = vld [vmem:[%s1477 + $0x8] sm:$0xff]
      %v1480 = vld [vmem:[%s1477 + $0x18] sm:$0xff]
      %v1481 = vld [vmem:[%s1477 + $0x20] sm:$0xff]
      %v1482 = vld [vmem:[%s1477 + $0x30] sm:$0xff]
      %v1483 = vld [vmem:[%s1477 + $0x38] sm:$0xff]
      %v1484 = vld [vmem:[%s1477 + $0x48] sm:$0xff]
      %v1485 = vld [vmem:[%s1477 + $0x50] sm:$0xff]
      %v1486 = vld [vmem:[%s1477 + $0x60] sm:$0xff]
      %v1487 = vld [vmem:[%s1477 + $0x68] sm:$0xff]
      %v1488 = vld [vmem:[%s1477 + $0x78] sm:$0xff]
      %v1489 = vld [vmem:[%s1477 + $0x80] sm:$0xff]
      %v1490 = vld [vmem:[%s1477 + $0x90] sm:$0xff]
      %v1491 = vld [vmem:[%s1477 + $0x98] sm:$0xff]
      %v1492 = vld [vmem:[%s1477 + $0xa8] sm:$0xff]
      %v1493 = vld [vmem:[%s1477 + $0xb0] sm:$0xff]
      %v1494 = vld [vmem:[%s1477 + $0xc0] sm:$0xff]
      %v1495 = vld [vmem:[%s1477 + $0xc8] sm:$0xff]
      %v1496 = vld [vmem:[%s1477 + $0xd8] sm:$0xff]
      %v1497 = vld [vmem:[%s1477 + $0xe0] sm:$0xff]
      %v1498 = vmul.f32 %v1478, %v957
      %v1499 = vmul.f32 %v1479, %v957
      %v1500 = vmul.f32 %v1480, %v957
      %v1501 = vmul.f32 %v1481, %v957
      %v1502 = vmul.f32 %v1482, %v957
      %v1503 = vmul.f32 %v1483, %v957
      %v1504 = vmul.f32 %v1484, %v957
      %v1505 = vmul.f32 %v1485, %v957
      %v1506 = vmul.f32 %v1486, %v957
      %v1507 = vmul.f32 %v1487, %v957
      %v1508 = vmul.f32 %v1488, %v957
      %v1509 = vmul.f32 %v1489, %v957
      %v1510 = vmul.f32 %v1490, %v957
      %v1511 = vmul.f32 %v1491, %v957
      %v1512 = vmul.f32 %v1492, %v957
      %v1513 = vmul.f32 %v1493, %v957
      %v1514 = vadd.f32 %v1498, 0.0
      %v1515 = vadd.f32 %v1499, 0.0
      %v1516 = vadd.f32 %v1500, 0.0
      %v1517 = vadd.f32 %v1501, 0.0
      %v1518 = vadd.f32 %v1502, 0.0
      %v1519 = vadd.f32 %v1503, 0.0
      %v1520 = vadd.f32 %v1504, 0.0
      %v1521 = vadd.f32 %v1505, 0.0
      %v1522 = vadd.f32 %v1506, 0.0
      %v1523 = vadd.f32 %v1507, 0.0
      %v1524 = vadd.f32 %v1508, 0.0
      %v1525 = vadd.f32 %v1509, 0.0
      %v1526 = vadd.f32 %v1510, 0.0
      %v1527 = vadd.f32 %v1511, 0.0
      %v1528 = vadd.f32 %v1512, 0.0
      %v1529 = vadd.f32 %v1513, 0.0
      %v1530 = vmul.f32 %v1480, %v993
      %v1531 = vmul.f32 %v1481, %v993
      %v1532 = vmul.f32 %v1482, %v993
      %v1533 = vmul.f32 %v1483, %v993
      %v1534 = vmul.f32 %v1484, %v993
      %v1535 = vmul.f32 %v1485, %v993
      %v1536 = vmul.f32 %v1486, %v993
      %v1537 = vmul.f32 %v1487, %v993
      %v1538 = vmul.f32 %v1488, %v993
      %v1539 = vmul.f32 %v1489, %v993
      %v1540 = vmul.f32 %v1490, %v993
      %v1541 = vmul.f32 %v1491, %v993
      %v1542 = vmul.f32 %v1492, %v993
      %v1543 = vmul.f32 %v1493, %v993
      %v1544 = vmul.f32 %v1494, %v993
      %v1545 = vmul.f32 %v1495, %v993
      %v1546 = vadd.f32 %v1514, %v1530
      %v1547 = vadd.f32 %v1515, %v1531
      %v1548 = vadd.f32 %v1516, %v1532
      %v1549 = vadd.f32 %v1517, %v1533
      %v1550 = vadd.f32 %v1518, %v1534
      %v1551 = vadd.f32 %v1519, %v1535
      %v1552 = vadd.f32 %v1520, %v1536
      %v1553 = vadd.f32 %v1521, %v1537
      %v1554 = vadd.f32 %v1522, %v1538
      %v1555 = vadd.f32 %v1523, %v1539
      %v1556 = vadd.f32 %v1524, %v1540
      %v1557 = vadd.f32 %v1525, %v1541
      %v1558 = vadd.f32 %v1526, %v1542
      %v1559 = vadd.f32 %v1527, %v1543
      %v1560 = vadd.f32 %v1528, %v1544
      %v1561 = vadd.f32 %v1529, %v1545
      %v1562 = vmul.f32 %v1482, %v1029
      %v1563 = vmul.f32 %v1483, %v1029
      %v1564 = vmul.f32 %v1484, %v1029
      %v1565 = vmul.f32 %v1485, %v1029
      %v1566 = vmul.f32 %v1486, %v1029
      %v1567 = vmul.f32 %v1487, %v1029
      %v1568 = vmul.f32 %v1488, %v1029
      %v1569 = vmul.f32 %v1489, %v1029
      %v1570 = vmul.f32 %v1490, %v1029
      %v1571 = vmul.f32 %v1491, %v1029
      %v1572 = vmul.f32 %v1492, %v1029
      %v1573 = vmul.f32 %v1493, %v1029
      %v1574 = vmul.f32 %v1494, %v1029
      %v1575 = vmul.f32 %v1495, %v1029
      %v1576 = vmul.f32 %v1496, %v1029
      %v1577 = vmul.f32 %v1497, %v1029
      %v1578 = vadd.f32 %v1546, %v1562
      %v1579 = vadd.f32 %v1547, %v1563
      %v1580 = vadd.f32 %v1548, %v1564
      %v1581 = vadd.f32 %v1549, %v1565
      %v1582 = vadd.f32 %v1550, %v1566
      %v1583 = vadd.f32 %v1551, %v1567
      %v1584 = vadd.f32 %v1552, %v1568
      %v1585 = vadd.f32 %v1553, %v1569
      %v1586 = vadd.f32 %v1554, %v1570
      %v1587 = vadd.f32 %v1555, %v1571
      %v1588 = vadd.f32 %v1556, %v1572
      %v1589 = vadd.f32 %v1557, %v1573
      %v1590 = vadd.f32 %v1558, %v1574
      %v1591 = vadd.f32 %v1559, %v1575
      %v1592 = vadd.f32 %v1560, %v1576
      %v1593 = vadd.f32 %v1561, %v1577
      %v1594 = vld [vmem:[%s1477 + $0x1] sm:$0xff]
      %v1595 = vld [vmem:[%s1477 + $0x9] sm:$0xff]
      %v1596 = vld [vmem:[%s1477 + $0x19] sm:$0xff]
      %v1597 = vld [vmem:[%s1477 + $0x21] sm:$0xff]
      %v1598 = vld [vmem:[%s1477 + $0x31] sm:$0xff]
      %v1599 = vld [vmem:[%s1477 + $0x39] sm:$0xff]
      %v1600 = vld [vmem:[%s1477 + $0x49] sm:$0xff]
      %v1601 = vld [vmem:[%s1477 + $0x51] sm:$0xff]
      %v1602 = vld [vmem:[%s1477 + $0x61] sm:$0xff]
      %v1603 = vld [vmem:[%s1477 + $0x69] sm:$0xff]
      %v1604 = vld [vmem:[%s1477 + $0x79] sm:$0xff]
      %v1605 = vld [vmem:[%s1477 + $0x81] sm:$0xff]
      %v1606 = vld [vmem:[%s1477 + $0x91] sm:$0xff]
      %v1607 = vld [vmem:[%s1477 + $0x99] sm:$0xff]
      %v1608 = vld [vmem:[%s1477 + $0xa9] sm:$0xff]
      %v1609 = vld [vmem:[%s1477 + $0xb1] sm:$0xff]
      %v1610 = vld [vmem:[%s1477 + $0xc1] sm:$0xff]
      %v1611 = vld [vmem:[%s1477 + $0xc9] sm:$0xff]
      %v1612 = vld [vmem:[%s1477 + $0xd9] sm:$0xff]
      %v1613 = vld [vmem:[%s1477 + $0xe1] sm:$0xff]
      %v1614 = vmul.f32 %v1594, %v1085
      %v1615 = vmul.f32 %v1595, %v1085
      %v1616 = vmul.f32 %v1596, %v1085
      %v1617 = vmul.f32 %v1597, %v1085
      %v1618 = vmul.f32 %v1598, %v1085
      %v1619 = vmul.f32 %v1599, %v1085
      %v1620 = vmul.f32 %v1600, %v1085
      %v1621 = vmul.f32 %v1601, %v1085
      %v1622 = vmul.f32 %v1602, %v1085
      %v1623 = vmul.f32 %v1603, %v1085
      %v1624 = vmul.f32 %v1604, %v1085
      %v1625 = vmul.f32 %v1605, %v1085
      %v1626 = vmul.f32 %v1606, %v1085
      %v1627 = vmul.f32 %v1607, %v1085
      %v1628 = vmul.f32 %v1608, %v1085
      %v1629 = vmul.f32 %v1609, %v1085
      %v1630 = vadd.f32 %v1578, %v1614
      %v1631 = vadd.f32 %v1579, %v1615
      %v1632 = vadd.f32 %v1580, %v1616
      %v1633 = vadd.f32 %v1581, %v1617
      %v1634 = vadd.f32 %v1582, %v1618
      %v1635 = vadd.f32 %v1583, %v1619
      %v1636 = vadd.f32 %v1584, %v1620
      %v1637 = vadd.f32 %v1585, %v1621
      %v1638 = vadd.f32 %v1586, %v1622
      %v1639 = vadd.f32 %v1587, %v1623
      %v1640 = vadd.f32 %v1588, %v1624
      %v1641 = vadd.f32 %v1589, %v1625
      %v1642 = vadd.f32 %v1590, %v1626
      %v1643 = vadd.f32 %v1591, %v1627
      %v1644 = vadd.f32 %v1592, %v1628
      %v1645 = vadd.f32 %v1593, %v1629
      %v1646 = vmul.f32 %v1596, %v1121
      %v1647 = vmul.f32 %v1597, %v1121
      %v1648 = vmul.f32 %v1598, %v1121
      %v1649 = vmul.f32 %v1599, %v1121
      %v1650 = vmul.f32 %v1600, %v1121
      %v1651 = vmul.f32 %v1601, %v1121
      %v1652 = vmul.f32 %v1602, %v1121
      %v1653 = vmul.f32 %v1603, %v1121
      %v1654 = vmul.f32 %v1604, %v1121
      %v1655 = vmul.f32 %v1605, %v1121
      %v1656 = vmul.f32 %v1606, %v1121
      %v1657 = vmul.f32 %v1607, %v1121
      %v1658 = vmul.f32 %v1608, %v1121
      %v1659 = vmul.f32 %v1609, %v1121
      %v1660 = vmul.f32 %v1610, %v1121
      %v1661 = vmul.f32 %v1611, %v1121
      %v1662 = vadd.f32 %v1630, %v1646
      %v1663 = vadd.f32 %v1631, %v1647
      %v1664 = vadd.f32 %v1632, %v1648
      %v1665 = vadd.f32 %v1633, %v1649
      %v1666 = vadd.f32 %v1634, %v1650
      %v1667 = vadd.f32 %v1635, %v1651
      %v1668 = vadd.f32 %v1636, %v1652
      %v1669 = vadd.f32 %v1637, %v1653
      %v1670 = vadd.f32 %v1638, %v1654
      %v1671 = vadd.f32 %v1639, %v1655
      %v1672 = vadd.f32 %v1640, %v1656
      %v1673 = vadd.f32 %v1641, %v1657
      %v1674 = vadd.f32 %v1642, %v1658
      %v1675 = vadd.f32 %v1643, %v1659
      %v1676 = vadd.f32 %v1644, %v1660
      %v1677 = vadd.f32 %v1645, %v1661
      %v1678 = vmul.f32 %v1598, %v1157
      %v1679 = vmul.f32 %v1599, %v1157
      %v1680 = vmul.f32 %v1600, %v1157
      %v1681 = vmul.f32 %v1601, %v1157
      %v1682 = vmul.f32 %v1602, %v1157
      %v1683 = vmul.f32 %v1603, %v1157
      %v1684 = vmul.f32 %v1604, %v1157
      %v1685 = vmul.f32 %v1605, %v1157
      %v1686 = vmul.f32 %v1606, %v1157
      %v1687 = vmul.f32 %v1607, %v1157
      %v1688 = vmul.f32 %v1608, %v1157
      %v1689 = vmul.f32 %v1609, %v1157
      %v1690 = vmul.f32 %v1610, %v1157
      %v1691 = vmul.f32 %v1611, %v1157
      %v1692 = vmul.f32 %v1612, %v1157
      %v1693 = vmul.f32 %v1613, %v1157
      %v1694 = vadd.f32 %v1662, %v1678
      %v1695 = vadd.f32 %v1663, %v1679
      %v1696 = vadd.f32 %v1664, %v1680
      %v1697 = vadd.f32 %v1665, %v1681
      %v1698 = vadd.f32 %v1666, %v1682
      %v1699 = vadd.f32 %v1667, %v1683
      %v1700 = vadd.f32 %v1668, %v1684
      %v1701 = vadd.f32 %v1669, %v1685
      %v1702 = vadd.f32 %v1670, %v1686
      %v1703 = vadd.f32 %v1671, %v1687
      %v1704 = vadd.f32 %v1672, %v1688
      %v1705 = vadd.f32 %v1673, %v1689
      %v1706 = vadd.f32 %v1674, %v1690
      %v1707 = vadd.f32 %v1675, %v1691
      %v1708 = vadd.f32 %v1676, %v1692
      %v1709 = vadd.f32 %v1677, %v1693
      %v1710 = vld [vmem:[%s1477 + $0x2] sm:$0xff]
      %v1711 = vld [vmem:[%s1477 + $0xa] sm:$0xff]
      %v1712 = vld [vmem:[%s1477 + $0x1a] sm:$0xff]
      %v1713 = vld [vmem:[%s1477 + $0x22] sm:$0xff]
      %v1714 = vld [vmem:[%s1477 + $0x32] sm:$0xff]
      %v1715 = vld [vmem:[%s1477 + $0x3a] sm:$0xff]
      %v1716 = vld [vmem:[%s1477 + $0x4a] sm:$0xff]
      %v1717 = vld [vmem:[%s1477 + $0x52] sm:$0xff]
      %v1718 = vld [vmem:[%s1477 + $0x62] sm:$0xff]
      %v1719 = vld [vmem:[%s1477 + $0x6a] sm:$0xff]
      %v1720 = vld [vmem:[%s1477 + $0x7a] sm:$0xff]
      %v1721 = vld [vmem:[%s1477 + $0x82] sm:$0xff]
      %v1722 = vld [vmem:[%s1477 + $0x92] sm:$0xff]
      %v1723 = vld [vmem:[%s1477 + $0x9a] sm:$0xff]
      %v1724 = vld [vmem:[%s1477 + $0xaa] sm:$0xff]
      %v1725 = vld [vmem:[%s1477 + $0xb2] sm:$0xff]
      %v1726 = vld [vmem:[%s1477 + $0xc2] sm:$0xff]
      %v1727 = vld [vmem:[%s1477 + $0xca] sm:$0xff]
      %v1728 = vld [vmem:[%s1477 + $0xda] sm:$0xff]
      %v1729 = vld [vmem:[%s1477 + $0xe2] sm:$0xff]
      %v1730 = vmul.f32 %v1710, %v1213
      %v1731 = vmul.f32 %v1711, %v1213
      %v1732 = vmul.f32 %v1712, %v1213
      %v1733 = vmul.f32 %v1713, %v1213
      %v1734 = vmul.f32 %v1714, %v1213
      %v1735 = vmul.f32 %v1715, %v1213
      %v1736 = vmul.f32 %v1716, %v1213
      %v1737 = vmul.f32 %v1717, %v1213
      %v1738 = vmul.f32 %v1718, %v1213
      %v1739 = vmul.f32 %v1719, %v1213
      %v1740 = vmul.f32 %v1720, %v1213
      %v1741 = vmul.f32 %v1721, %v1213
      %v1742 = vmul.f32 %v1722, %v1213
      %v1743 = vmul.f32 %v1723, %v1213
      %v1744 = vmul.f32 %v1724, %v1213
      %v1745 = vmul.f32 %v1725, %v1213
      %v1746 = vadd.f32 %v1694, %v1730
      %v1747 = vadd.f32 %v1695, %v1731
      %v1748 = vadd.f32 %v1696, %v1732
      %v1749 = vadd.f32 %v1697, %v1733
      %v1750 = vadd.f32 %v1698, %v1734
      %v1751 = vadd.f32 %v1699, %v1735
      %v1752 = vadd.f32 %v1700, %v1736
      %v1753 = vadd.f32 %v1701, %v1737
      %v1754 = vadd.f32 %v1702, %v1738
      %v1755 = vadd.f32 %v1703, %v1739
      %v1756 = vadd.f32 %v1704, %v1740
      %v1757 = vadd.f32 %v1705, %v1741
      %v1758 = vadd.f32 %v1706, %v1742
      %v1759 = vadd.f32 %v1707, %v1743
      %v1760 = vadd.f32 %v1708, %v1744
      %v1761 = vadd.f32 %v1709, %v1745
      %v1762 = vmul.f32 %v1712, %v1249
      %v1763 = vmul.f32 %v1713, %v1249
      %v1764 = vmul.f32 %v1714, %v1249
      %v1765 = vmul.f32 %v1715, %v1249
      %v1766 = vmul.f32 %v1716, %v1249
      %v1767 = vmul.f32 %v1717, %v1249
      %v1768 = vmul.f32 %v1718, %v1249
      %v1769 = vmul.f32 %v1719, %v1249
      %v1770 = vmul.f32 %v1720, %v1249
      %v1771 = vmul.f32 %v1721, %v1249
      %v1772 = vmul.f32 %v1722, %v1249
      %v1773 = vmul.f32 %v1723, %v1249
      %v1774 = vmul.f32 %v1724, %v1249
      %v1775 = vmul.f32 %v1725, %v1249
      %v1776 = vmul.f32 %v1726, %v1249
      %v1777 = vmul.f32 %v1727, %v1249
      %v1778 = vadd.f32 %v1746, %v1762
      %v1779 = vadd.f32 %v1747, %v1763
      %v1780 = vadd.f32 %v1748, %v1764
      %v1781 = vadd.f32 %v1749, %v1765
      %v1782 = vadd.f32 %v1750, %v1766
      %v1783 = vadd.f32 %v1751, %v1767
      %v1784 = vadd.f32 %v1752, %v1768
      %v1785 = vadd.f32 %v1753, %v1769
      %v1786 = vadd.f32 %v1754, %v1770
      %v1787 = vadd.f32 %v1755, %v1771
      %v1788 = vadd.f32 %v1756, %v1772
      %v1789 = vadd.f32 %v1757, %v1773
      %v1790 = vadd.f32 %v1758, %v1774
      %v1791 = vadd.f32 %v1759, %v1775
      %v1792 = vadd.f32 %v1760, %v1776
      %v1793 = vadd.f32 %v1761, %v1777
      %v1794 = vmul.f32 %v1714, %v1285
      %v1795 = vmul.f32 %v1715, %v1285
      %v1796 = vmul.f32 %v1716, %v1285
      %v1797 = vmul.f32 %v1717, %v1285
      %v1798 = vmul.f32 %v1718, %v1285
      %v1799 = vmul.f32 %v1719, %v1285
      %v1800 = vmul.f32 %v1720, %v1285
      %v1801 = vmul.f32 %v1721, %v1285
      %v1802 = vmul.f32 %v1722, %v1285
      %v1803 = vmul.f32 %v1723, %v1285
      %v1804 = vmul.f32 %v1724, %v1285
      %v1805 = vmul.f32 %v1725, %v1285
      %v1806 = vmul.f32 %v1726, %v1285
      %v1807 = vmul.f32 %v1727, %v1285
      %v1808 = vmul.f32 %v1728, %v1285
      %v1809 = vmul.f32 %v1729, %v1285
      %v1810 = vadd.f32 %v1778, %v1794
      %v1811 = vadd.f32 %v1779, %v1795
      %v1812 = vadd.f32 %v1780, %v1796
      %v1813 = vadd.f32 %v1781, %v1797
      %v1814 = vadd.f32 %v1782, %v1798
      %v1815 = vadd.f32 %v1783, %v1799
      %v1816 = vadd.f32 %v1784, %v1800
      %v1817 = vadd.f32 %v1785, %v1801
      %v1818 = vadd.f32 %v1786, %v1802
      %v1819 = vadd.f32 %v1787, %v1803
      %v1820 = vadd.f32 %v1788, %v1804
      %v1821 = vadd.f32 %v1789, %v1805
      %v1822 = vadd.f32 %v1790, %v1806
      %v1823 = vadd.f32 %v1791, %v1807
      %v1824 = vadd.f32 %v1792, %v1808
      %v1825 = vadd.f32 %v1793, %v1809
      %v1826 = vadd.f32 %v1810, %v1322
      %v1827 = vadd.f32 %v1811, %v1322
      %v1828 = vadd.f32 %v1812, %v1322
      %v1829 = vadd.f32 %v1813, %v1322
      %v1830 = vadd.f32 %v1814, %v1322
      %v1831 = vadd.f32 %v1815, %v1322
      %v1832 = vadd.f32 %v1816, %v1322
      %v1833 = vadd.f32 %v1817, %v1322
      %v1834 = vadd.f32 %v1818, %v1322
      %v1835 = vadd.f32 %v1819, %v1322
      %v1836 = vadd.f32 %v1820, %v1322
      %v1837 = vadd.f32 %v1821, %v1322
      %v1838 = vadd.f32 %v1822, %v1322
      %v1839 = vadd.f32 %v1823, %v1322
      %v1840 = vadd.f32 %v1824, %v1322
      %v1841 = vadd.f32 %v1825, %v1322
      %v1842 = vmax.f32 %v1826, 0.0
      %v1843 = vmax.f32 %v1827, 0.0
      %v1844 = vmax.f32 %v1828, 0.0
      %v1845 = vmax.f32 %v1829, 0.0
      %v1846 = vmax.f32 %v1830, 0.0
      %v1847 = vmax.f32 %v1831, 0.0
      %v1848 = vmax.f32 %v1832, 0.0
      %v1849 = vmax.f32 %v1833, 0.0
      %v1850 = vmax.f32 %v1834, 0.0
      %v1851 = vmax.f32 %v1835, 0.0
      %v1852 = vmax.f32 %v1836, 0.0
      %v1853 = vmax.f32 %v1837, 0.0
      %v1854 = vmax.f32 %v1838, 0.0
      %v1855 = vmax.f32 %v1839, 0.0
      %v1856 = vmax.f32 %v1840, 0.0
      %v1857 = vmax.f32 %v1841, 0.0
      %v1858 = vpack.c.bf16 %v1843, %v1842
      %v1859 = vpack.c.bf16 %v1845, %v1844
      %v1860 = vpack.c.bf16 %v1847, %v1846
      %v1861 = vpack.c.bf16 %v1849, %v1848
      %v1862 = vpack.c.bf16 %v1851, %v1850
      %v1863 = vpack.c.bf16 %v1853, %v1852
      %v1864 = vpack.c.bf16 %v1855, %v1854
      %v1865 = vpack.c.bf16 %v1857, %v1856
      %v1867 = vsel %vm823, %v1858, 0
      %v1870 = vsel %vm823, %v1859, 0
      %v1873 = vsel %vm823, %v1860, 0
      %v1876 = vsel %vm823, %v1861, 0
      %v1879 = vsel %vm823, %v1862, 0
      %v1882 = vsel %vm823, %v1863, 0
      %v1885 = vsel %vm823, %v1864, 0
      %v1888 = vsel %vm823, %v1865, 0
      %1890 = vmatprep.subr.bf16.mxu0 0
      %1891 = vmatpush1.bf16.xpose.msra.mxu0 %v1867
      %1892 = vmatprep.subr.bf16.mxu0 0
      %1893 = vmatpush1.bf16.xpose.msra.mxu0 %v1870
      %1894 = vmatprep.subr.bf16.mxu0 0
      %1895 = vmatpush1.bf16.xpose.msra.mxu0 %v1873
      %1896 = vmatprep.subr.bf16.mxu0 0
      %1897 = vmatpush1.bf16.xpose.msra.mxu0 %v1876
      %1898 = vmatprep.subr.bf16.mxu0 0
      %1899 = vmatpush1.bf16.xpose.msra.mxu0 %v1879
      %1900 = vmatprep.subr.bf16.mxu0 0
      %1901 = vmatpush1.bf16.xpose.msra.mxu0 %v1882
      %1902 = vmatprep.subr.bf16.mxu0 0
      %1903 = vmatpush1.bf16.xpose.msra.mxu0 %v1885
      %1904 = vmatprep.subr.bf16.mxu0 0
      %1905 = vmatpush1.bf16.xpose.msra.mxu0 %v1888
      %1906 = vmatprep.subr.bf16.mxu0 0
      %1907 = vmatpush1.bf16.xpose.msra.mxu0 0
      %1908 = vmatprep.subr.bf16.mxu0 0
      %1909 = vmatpush1.bf16.xpose.msra.mxu0 0
      %1910 = vmatprep.subr.bf16.mxu0 0
      %1911 = vmatpush1.bf16.xpose.msra.mxu0 0
      %1912 = vmatprep.subr.bf16.mxu0 0
      %1913 = vmatpush1.bf16.xpose.msra.mxu0 0
      %1914 = vmatprep.subr.bf16.mxu0 0
      %1915 = vmatpush1.bf16.xpose.msra.mxu0 0
      %1916 = vmatprep.subr.bf16.mxu0 0
      %1917 = vmatpush1.bf16.xpose.msra.mxu0 0
      %1918 = vmatprep.subr.bf16.mxu0 0
      %1919 = vmatpush1.bf16.xpose.msra.mxu0 0
      %1920 = vmatprep.subr.bf16.mxu0 0
      %1921 = vmatpush1.bf16.xpose.msra.mxu0 0
      %1922 = vmatprep.mubr.bf16.mxu0 0
      %1923 = vmatmul.mubr.bf16.gmra.mrb[0].mxu0 %v1395
      %v1924 = vpop.f32.mrb[0].mxu0
      %v1925 = vadd.f32 %v1367, %v1924
      %v1926 = vpop.f32.mrb[0].mxu0
      %v1927 = vpop.f32.mrb[0].mxu0
      %v1928 = vadd.f32 %v1372, %v1927
      %v1929 = vpop.f32.mrb[0].mxu0
      %1930 = vmatprep.mubr.bf16.mxu0 0
      %1931 = vmatmul.mubr.bf16.gmra.mrb[0].mxu0 %v1398
      %v1932 = vpop.f32.mrb[0].mxu0
      %v1933 = vadd.f32 %v1377, %v1932
      %v1934 = vpop.f32.mrb[0].mxu0
      %v1935 = vpop.f32.mrb[0].mxu0
      %v1936 = vadd.f32 %v1382, %v1935
      %v1937 = vpop.f32.mrb[0].mxu0
      %1938 = vdwg.mxu0
      %1939 = vst [vmem:[%s278 + $0x8] sm:$0xff] %v1925
      %1940 = vst [vmem:[%s278 + $0x18] sm:$0xff] %v1928
      %1941 = vst [vmem:[%s278 + $0x28] sm:$0xff] %v1933
      %1942 = vst [vmem:[%s278 + $0x38] sm:$0xff] %v1936
      %p1943 = scmp.lt.s32.totalorder %s18, 1
      %s1944 = scalar_select %p1943, %s18, 1
      %s1945 = smul.addr %s1944, 8
      %s1946 = smul.addr %s1945, 8
      %s1947 = scalar_lea.vmem %s7, %s1946
      // Predicated region
      $region49: #{ffn_forward.1} parent=47 // pred_check
        %p1948 = pneg %p188
      $region50: #{ffn_forward.1} parent=47 // pred_check_branch
        %1950 = sbr.rel (%p1948) target = $region52
      $region51: #{ffn_forward.1} parent=47 // pred_region
        _
      $region52: #{ffn_forward.1} parent=47 // pred_fallthru
        _
    $region48: #{ffn_forward.1} parent=5 // pred_fallthru
      _
    %p1951 = scmp.le.s32.totalorder 2, %s13
    // Predicated region
    $region53: #{ffn_forward.1} parent=5 // pred_check
      %p1952 = pneg %p1951
    $region54: #{ffn_forward.1} parent=5 // pred_check_branch
      %1954 = sbr.rel (%p1952) target = $region56
    $region55: #{ffn_forward.1} parent=5 // pred_region
      %s1955 = ssub.s32 %s13, 2
      // Predicated region
      $region57: #{ffn_forward.1} parent=55 // pred_check
        %p1956 = pneg %p194
      $region58: #{ffn_forward.1} parent=55 // pred_check_branch
        %1958 = sbr.rel (%p1956) target = $region60
      $region59: #{ffn_forward.1} parent=55 // pred_region
        %p1959 = scmp.lt.s32.totalorder %s19, 1
        %s1960 = scalar_select %p1959, %s19, 1
        %s1961 = smul.addr %s1960, 8
        %s1962 = smul.addr %s1961, 8
        %s1963 = scalar_lea.vmem %s7, %s1962
      $region60: #{ffn_forward.1} parent=55 // pred_fallthru
        _
    $region56: #{ffn_forward.1} parent=5 // pred_fallthru
      _
  $region6: #{ffn_forward.1} parent=0 // loop_footer
    %s17 = sadd.s32 1, %s13
  $region7: #{ffn_forward.1} parent=0 // loop_footer_branch
    %12 = sbr.rel target = $region3
  $region8: #{ffn_forward.1} parent=0 // loop_exit
    _

</llo_original>
